<compile_context>
chip_gen: v7x
topology: tpu7x:2x2x1
jax: 0.10.0
libtpu: 0.0.40
codegen_flags: <defaults>
</compile_context>

<pallas_src>
import functools

import jax
import jax.numpy as jnp
import numpy as np
from jax.experimental import pallas as pl
from jax.experimental.pallas import tpu as pltpu


# ----------------------------- Pallas kernel -----------------------------
def tcn_kernel(x_ref, ebias_ref, w1x_ref, w3_ref, b3_ref, chp_ref, prelu_ref,
               out_ref, ypad_ref, zbuf_ref, stats_ref,
               *, K, dil, pad, halo, t_tile, n_time, hidden, eps, elem_dtype):
    p = pl.program_id(1)          # phase: 0=conv_in+stats1, 1=dwconv+stats2, 2=conv_out
    t = pl.program_id(2)          # time tile
    TT, H, T = t_tile, hidden, n_time
    f32 = jnp.float32

    a1 = prelu_ref[0]             # PReLU scalars from SMEM
    a2 = prelu_ref[1]

    chp = chp_ref[...]            # packed per-channel params (H, 5+K), resident
    g1w, g1b = chp[:, 0:1], chp[:, 1:2]
    g2w, g2b = chp[:, 2:3], chp[:, 3:4]
    bdw = chp[:, 4:5]

    n = H * T
    inv_n = 1.0 / n
    inv_nm1 = 1.0 / (n - 1)

    def prelu(v, a):
        return jnp.where(v > 0, v, v * a.astype(v.dtype))

    def gln_scale_shift(s, ss, w, b):
        # s / ss: (1,1) f32 running sum / sum-of-squares over the whole (H,T)
        # activation map (accumulated per-tile in f32).  Folded affine:
        #   GLN(v) = v * scale + shift
        mean = s * inv_n
        var = (ss - s * mean) * inv_nm1            # unbiased (n-1) variance
        inv_std = jax.lax.rsqrt(var + eps)         # EUP
        scale = w * inv_std                        # (H, 1)
        shift = b - mean * scale                   # (H, 1)
        return scale, shift

    # ---- one-time per-batch init -----------------------------------------
    @pl.when(jnp.logical_and(p == 0, t == 0))
    def _init():
        stats_ref[...] = jnp.zeros_like(stats_ref)
        # zero the lane-aligned halos of the y scratch (global zero padding
        # of the depthwise conv); never written elsewhere.
        ypad_ref[:, :halo] = jnp.zeros((H, halo), ypad_ref.dtype)
        ypad_ref[:, halo + T:] = jnp.zeros((H, halo), ypad_ref.dtype)

    # ---- phase 0: conv1x1_in (MXU) + PReLU, store y, accumulate GLN1 stats
    @pl.when(p == 0)
    def _phase_a():
        y = jnp.dot(w1x_ref[...], x_ref[...],
                    preferred_element_type=f32)            # (H, TT) f32
        y = prelu(y + ebias_ref[...], a1)
        stats_ref[0:1, :] += jnp.sum(y, keepdims=True)
        stats_ref[1:2, :] += jnp.sum(y * y, keepdims=True)
        i0 = pl.multiple_of(halo + t * TT, 128)
        ypad_ref[:, pl.ds(i0, TT)] = y.astype(ypad_ref.dtype)

    # ---- phase 1: GLN1 apply + depthwise dilated conv + PReLU, GLN2 stats -
    @pl.when(p == 1)
    def _phase_b():
        scale1, shift1 = gln_scale_shift(stats_ref[0:1, :], stats_ref[1:2, :],
                                         g1w, g1b)
        sc1 = scale1.astype(elem_dtype)
        sh1 = shift1.astype(elem_dtype)
        w0 = pl.multiple_of(t * TT, 128)
        win = ypad_ref[:, pl.ds(w0, TT + 2 * halo)].astype(elem_dtype)
        # single validity mask: conv zero-padding happens AFTER the GLN
        # affine, so out-of-range halo columns must stay exactly zero.
        gcol = (jax.lax.broadcasted_iota(jnp.int32, (1, TT + 2 * halo), 1)
                + (t * TT - halo))
        valid = jnp.logical_and(gcol >= 0, gcol < T)
        win = jnp.where(valid, win * sc1 + sh1, jnp.array(0.0, elem_dtype))

        acc = None
        for k in range(K):                                  # static, small
            off = k * dil - pad
            tap = win[:, halo + off: halo + off + TT]       # static XLU slice
            wk = chp[:, 5 + k: 6 + k].astype(elem_dtype)
            contrib = wk * tap
            acc = contrib if acc is None else acc + contrib
        z = prelu(acc + bdw.astype(elem_dtype), a2)

        zf = z.astype(f32)
        stats_ref[2:3, :] += jnp.sum(zf, keepdims=True)
        stats_ref[3:4, :] += jnp.sum(zf * zf, keepdims=True)
        z0 = pl.multiple_of(t * TT, 128)
        zbuf_ref[:, pl.ds(z0, TT)] = z.astype(zbuf_ref.dtype)

    # ---- phase 2: GLN2 apply + conv1x1_out (MXU) + residual ----------------
    @pl.when(p == 2)
    def _phase_c():
        scale2, shift2 = gln_scale_shift(stats_ref[2:3, :], stats_ref[3:4, :],
                                         g2w, g2b)
        z0 = pl.multiple_of(t * TT, 128)
        z = zbuf_ref[:, pl.ds(z0, TT)].astype(elem_dtype)
        zn = z * scale2.astype(elem_dtype) + shift2.astype(elem_dtype)
        out = jnp.dot(w3_ref[...], zn.astype(jnp.bfloat16),
                      preferred_element_type=f32)           # (C_in, TT)
        out = out + b3_ref[...] + x_ref[...].astype(f32)    # residual
        out_ref[...] = out.astype(out_ref.dtype)


# ------------------------------- wrapper ----------------------------------
def tcn_block_pallas(x, speaker_emb, params, *, de_cnn_k, de_cnn_dil,
                     t_tile=None, elem_dtype=jnp.float32):
    """elem_dtype=jnp.bfloat16 is recommended on v6e/v7x; keep f32 on v5e."""
    B, C_in, T = x.shape
    H = params["w1"].shape[0]
    K, dil = de_cnn_k, de_cnn_dil
    pad = (K - 1) * dil // 2
    assert 2 * pad == (K - 1) * dil, "depthwise conv must preserve length"

    # --- time tiling -------------------------------------------------------
    if t_tile is None:
        t_tile = T
        for cand in (2048, 1024, 512, 256, 128):
            if T % cand == 0:
                t_tile = cand
                break
    assert T % t_tile == 0, "T must be divisible by t_tile"
    n_t = T // t_tile
    assert t_tile % 128 == 0 or n_t == 1, "tiles must be lane-aligned"
    halo = max(128, ((pad + 127) // 128) * 128)   # lane-aligned halo >= pad

    f32, bf16 = jnp.float32, jnp.bfloat16

    # --- parameter preparation (XLA side, tiny) ----------------------------
    w1 = params["w1"].astype(f32)                                # (H, C_in+E)
    w1x = w1[:, :C_in].astype(bf16)                              # MXU operand
    w1e = w1[:, C_in:]                                           # (H, E)
    # speaker-emb contribution of conv1x1_in is time-invariant: fold it (and
    # the conv bias) into a per-batch (H, 1) bias.
    ebias = (speaker_emb.astype(f32) @ w1e.T
             + params["b1"].astype(f32)[None, :])[:, :, None]    # (B, H, 1)

    # pack all per-channel vectors into one resident buffer: 1 DMA, not ~8.
    chparams = jnp.concatenate(
        [params["g1w"].reshape(H, 1), params["g1b"].reshape(H, 1),
         params["g2w"].reshape(H, 1), params["g2b"].reshape(H, 1),
         params["bdw"].reshape(H, 1), params["wdw"].reshape(H, K)],
        axis=1).astype(f32)                                      # (H, 5+K)

    w3 = params["w3"].astype(bf16)                               # (C_in, H)
    b3 = params["b3"].reshape(C_in, 1).astype(f32)
    prelu_a = jnp.stack([jnp.asarray(params["a1"], f32),
                         jnp.asarray(params["a2"], f32)])        # (2,) -> SMEM

    # --- VMEM budget -> explicit vmem_limit_bytes ---------------------------
    def nbytes(shape, dt):
        return int(np.prod(shape)) * jnp.dtype(dt).itemsize
    scratch_bytes = (nbytes((H, T + 2 * halo), bf16) + nbytes((H, T), bf16)
                     + nbytes((4, 1), f32))
    block_bytes = 2 * (2 * nbytes((C_in, t_tile), bf16)          # x + out, dbl-buf
                       + nbytes((H, 1), f32) + nbytes((H, C_in), bf16)
                       + nbytes((C_in, H), bf16) + nbytes((C_in, 1), f32)
                       + nbytes((H, 5 + K), f32))
    work_bytes = 6 * nbytes((H, t_tile + 2 * halo), f32)         # live-tile headroom
    vmem_limit = int(min(96 << 20,
                         max(32 << 20,
                             scratch_bytes + block_bytes + work_bytes + (4 << 20))))

    kernel = functools.partial(
        tcn_kernel, K=K, dil=dil, pad=pad, halo=halo, t_tile=t_tile,
        n_time=T, hidden=H, eps=1e-5, elem_dtype=elem_dtype)

    # x only needed in phases 0 & 2; out only written in phase 2.  The
    # conditional block indices keep the blocks resident (no redundant DMA /
    # HBM write-back) during the other phases.
    def x_map(b, p, t):
        return (b, 0, jnp.where(p == 1, n_t - 1, t))

    def out_map(b, p, t):
        return (b, 0, jnp.where(p == 2, t, 0))

    def const(shape):
        return pl.BlockSpec(shape, lambda b, p, t: (0,) * len(shape))

    in_specs = [
        pl.BlockSpec((None, C_in, t_tile), x_map),               # x (bf16)
        pl.BlockSpec((None, H, 1), lambda b, p, t: (b, 0, 0)),   # ebias (f32)
        const((H, C_in)),                                        # w1x (bf16)
        const((C_in, H)),                                        # w3  (bf16)
        const((C_in, 1)),                                        # b3  (f32)
        const((H, 5 + K)),                                       # packed params
        pl.BlockSpec(memory_space=pltpu.MemorySpace.SMEM),       # PReLU scalars
    ]
    out_specs = pl.BlockSpec((None, C_in, t_tile), out_map)
    scratch_shapes = [
        pltpu.VMEM((H, T + 2 * halo), bf16),     # y (post-PReLU, pre-GLN1), halo'd
        pltpu.VMEM((H, T), bf16),                # z (post-PReLU, pre-GLN2)
        pltpu.VMEM((4, 1), f32),                 # GLN sum / sumsq accumulators
    ]

    out = pl.pallas_call(
        kernel,
        out_shape=jax.ShapeDtypeStruct((B, C_in, T), bf16),
        grid_spec=pltpu.PrefetchScalarGridSpec(
            num_scalar_prefetch=0,
            grid=(B, 3, n_t),
            in_specs=in_specs,
            out_specs=out_specs,
            scratch_shapes=scratch_shapes,
        ),
        compiler_params=pltpu.CompilerParams(
            # batch elements are independent -> shardable across TensorCores;
            # phase and time carry the GLN stats / scratch -> "arbitrary".
            dimension_semantics=("parallel", "arbitrary", "arbitrary"),
            vmem_limit_bytes=vmem_limit),
    )(x.astype(bf16), ebias, w1x, w3, b3, chparams, prelu_a)
    # module returns a tuple (out + x, speaker_emb)
    return out, speaker_emb


# --------------------------- pure-JAX reference ---------------------------
def _prelu_ref(v, a):
    return jnp.where(v > 0, v, a * v)


def _gln_ref(v, w, b, eps=1e-5):
    mean = jnp.mean(v, axis=(1, 2), keepdims=True)
    var = jnp.var(v, axis=(1, 2), keepdims=True, ddof=1)
    return (v - mean) / jnp.sqrt(var + eps) * w + b


def tcn_block_ref(x, emb, p, *, de_cnn_k, de_cnn_dil):
    K, dil = de_cnn_k, de_cnn_dil
    pad = (K - 1) * dil // 2
    B, C_in, T = x.shape
    rep = jnp.broadcast_to(emb[:, :, None], (B, emb.shape[1], T))
    h = jnp.concatenate([x, rep], axis=1)
    y = jnp.einsum("oc,bct->bot", p["w1"], h,
                   preferred_element_type=jnp.float32) + p["b1"][None, :, None]
    y = _gln_ref(_prelu_ref(y, p["a1"]), p["g1w"], p["g1b"])
    yp = jnp.pad(y, ((0, 0), (0, 0), (pad, pad)))
    z = jnp.zeros_like(y)
    for k in range(K):
        z = z + p["wdw"][None, :, k, None] * yp[:, :, k * dil:k * dil + T]
    z = z + p["bdw"][None, :, None]
    z = _gln_ref(_prelu_ref(z, p["a2"]), p["g2w"], p["g2b"])
    out = jnp.einsum("oc,bct->bot", p["w3"], z,
                     preferred_element_type=jnp.float32) + p["b3"][None, :, None]
    return out + x, emb


# --------------------------------- main -----------------------------------
if __name__ == "__main__":
    B, C_in, E, H, T = 2, 16, 8, 32, 512
    K, dil = 3, 2

    key = jax.random.PRNGKey(0)
    keys = jax.random.split(key, 16)

    x = jax.random.normal(keys[0], (B, C_in, T), jnp.float32)
    speaker_emb = jax.random.normal(keys[1], (B, E), jnp.float32)

    params = {
        # conv1x1_in: Conv1d(C_in + E, H, 1)
        "w1": 0.1 * jax.random.normal(keys[2], (H, C_in + E), jnp.float32),
        "b1": 0.1 * jax.random.normal(keys[3], (H,), jnp.float32),
        # PReLU (single shared parameter, torch default init 0.25)
        "a1": jnp.float32(0.25),
        # GlobalLayerNorm((H, 1))
        "g1w": 1.0 + 0.1 * jax.random.normal(keys[4], (H, 1), jnp.float32),
        "g1b": 0.1 * jax.random.normal(keys[5], (H, 1), jnp.float32),
        # depthwise Conv1d(H, H, groups=H, kernel_size=K, dilation=dil)
        "wdw": 0.1 * jax.random.normal(keys[6], (H, K), jnp.float32),
        "bdw": 0.1 * jax.random.normal(keys[7], (H,), jnp.float32),
        "a2": jnp.float32(0.2),
        "g2w": 1.0 + 0.1 * jax.random.normal(keys[8], (H, 1), jnp.float32),
        "g2b": 0.1 * jax.random.normal(keys[9], (H, 1), jnp.float32),
        # conv1x1_out: Conv1d(H, C_in, 1)
        "w3": 0.1 * jax.random.normal(keys[10], (C_in, H), jnp.float32),
        "b3": 0.1 * jax.random.normal(keys[11], (C_in,), jnp.float32),
    }

    # t_tile=128 -> 4 time tiles, exercising the halo'd depthwise taps and
    # the chunked two-sweep GLN.  (elem_dtype=jnp.bfloat16 for v6e/v7x.)
    out, emb_out = tcn_block_pallas(x, speaker_emb, params,
                                    de_cnn_k=K, de_cnn_dil=dil, t_tile=128)
    out = jax.block_until_ready(out)

    ref_out, _ = tcn_block_ref(x, speaker_emb, params,
                               de_cnn_k=K, de_cnn_dil=dil)
    ref_out = jax.block_until_ready(ref_out)

    # tolerance absorbs bf16 HBM I/O, bf16 MXU matmuls and the bf16 VMEM
    # intermediates (f32 accumulation / f32 GLN stats keep the error small).
    np.testing.assert_allclose(np.asarray(out.astype(jnp.float32)),
                               np.asarray(ref_out),
                               rtol=2e-2, atol=3e-2)
    assert out.shape == (B, C_in, T)
    assert emb_out.shape == (B, E)
    print("KERNEL_OK")
</pallas_src>

<mosaic_0001>
module attributes {stable_mosaic.version = 11 : i64} {
  func.func @tcn_kernel(%arg0: i32, %arg1: i32, %arg2: i32, %arg3: memref<1x16x128xbf16, #tpu.memory_space<vmem>>, %arg4: memref<1x32x1xf32, #tpu.memory_space<vmem>>, %arg5: memref<32x16xbf16, #tpu.memory_space<vmem>>, %arg6: memref<16x32xbf16, #tpu.memory_space<vmem>>, %arg7: memref<16x1xf32, #tpu.memory_space<vmem>>, %arg8: memref<32x8xf32, #tpu.memory_space<vmem>>, %arg9: memref<2xf32, #tpu.memory_space<smem>>, %arg10: memref<1x16x128xbf16, #tpu.memory_space<vmem>>, %arg11: memref<32x768xbf16, #tpu.memory_space<vmem>>, %arg12: memref<32x512xbf16, #tpu.memory_space<vmem>>, %arg13: memref<4x1xf32, #tpu.memory_space<vmem>>) attributes {dimension_semantics = [#tpu.dimension_semantics<parallel>, #tpu.dimension_semantics<arbitrary>, #tpu.dimension_semantics<arbitrary>], iteration_bounds = array<i64: 2, 3, 4>, scalar_prefetch = 0 : i64, scratch_operands = 3 : i64, tpu.core_type = #tpu.core_type<tc>, window_params = [{transform_indices = @transform_0, window_bounds = array<i64: 1, 16, 128>}, {transform_indices = @transform_1, window_bounds = array<i64: 1, 32, 1>}, {pipeline_mode = #tpu.pipeline_mode<synchronous>, transform_indices = @transform_2, window_bounds = array<i64: 32, 16>}, {pipeline_mode = #tpu.pipeline_mode<synchronous>, transform_indices = @transform_3, window_bounds = array<i64: 16, 32>}, {pipeline_mode = #tpu.pipeline_mode<synchronous>, transform_indices = @transform_4, window_bounds = array<i64: 16, 1>}, {pipeline_mode = #tpu.pipeline_mode<synchronous>, transform_indices = @transform_5, window_bounds = array<i64: 32, 8>}, {transform_indices = @transform_6, window_bounds = array<i64: 2>}, {transform_indices = @transform_7, window_bounds = array<i64: 1, 16, 128>}]} {
    %c0 = arith.constant 0 : index
    %0 = memref.load %arg9[%c0] : memref<2xf32, #tpu.memory_space<smem>>
    %c1 = arith.constant 1 : index
    %1 = memref.load %arg9[%c1] : memref<2xf32, #tpu.memory_space<smem>>
    %c0_0 = arith.constant 0 : index
    %c0_1 = arith.constant 0 : index
    %2 = vector.load %arg8[%c0_0, %c0_1] : memref<32x8xf32, #tpu.memory_space<vmem>>, vector<32x8xf32>
    %3 = vector.extract_strided_slice %2 {offsets = [0, 0], sizes = [32, 1], strides = [1, 1]} : vector<32x8xf32> to vector<32x1xf32>
    %4 = vector.extract_strided_slice %2 {offsets = [0, 1], sizes = [32, 1], strides = [1, 1]} : vector<32x8xf32> to vector<32x1xf32>
    %5 = vector.extract_strided_slice %2 {offsets = [0, 2], sizes = [32, 1], strides = [1, 1]} : vector<32x8xf32> to vector<32x1xf32>
    %6 = vector.extract_strided_slice %2 {offsets = [0, 3], sizes = [32, 1], strides = [1, 1]} : vector<32x8xf32> to vector<32x1xf32>
    %7 = vector.extract_strided_slice %2 {offsets = [0, 4], sizes = [32, 1], strides = [1, 1]} : vector<32x8xf32> to vector<32x1xf32>
    %c0_i32 = arith.constant 0 : i32
    %8 = arith.cmpi eq, %arg1, %c0_i32 : i32
    %c0_i32_2 = arith.constant 0 : i32
    %9 = arith.cmpi eq, %arg2, %c0_i32_2 : i32
    %10 = arith.andi %8, %9 : i1
    %11 = arith.extui %10 : i1 to i32
    %c0_i32_3 = arith.constant 0 : i32
    %12 = arith.cmpi ne, %11, %c0_i32_3 : i32
    scf.if %12 {
      %cst = arith.constant 0.000000e+00 : f32
      %22 = vector.broadcast %cst : f32 to vector<4x1xf32>
      %c0_8 = arith.constant 0 : index
      %c0_9 = arith.constant 0 : index
      %23 = vector.load %arg13[%c0_8, %c0_9] : memref<4x1xf32, #tpu.memory_space<vmem>>, vector<4x1xf32>
      tpu.vector_store %arg13[%c0_8, %c0_9], %22 {strides = array<i32>} : memref<4x1xf32, #tpu.memory_space<vmem>>, vector<4x1xf32>,
      %cst_10 = arith.constant 0.000000e+00 : bf16
      %24 = vector.broadcast %cst_10 : bf16 to vector<32x128xbf16>
      %c0_11 = arith.constant 0 : index
      %c0_12 = arith.constant 0 : index
      %25 = vector.load %arg11[%c0_11, %c0_12] : memref<32x768xbf16, #tpu.memory_space<vmem>>, vector<32x128xbf16>
      tpu.vector_store %arg11[%c0_11, %c0_12], %24 {strides = array<i32>} : memref<32x768xbf16, #tpu.memory_space<vmem>>, vector<32x128xbf16>,
      %cst_13 = arith.constant 0.000000e+00 : bf16
      %26 = vector.broadcast %cst_13 : bf16 to vector<32x128xbf16>
      %c0_14 = arith.constant 0 : index
      %c640 = arith.constant 640 : index
      %27 = vector.load %arg11[%c0_14, %c640] : memref<32x768xbf16, #tpu.memory_space<vmem>>, vector<32x128xbf16>
      tpu.vector_store %arg11[%c0_14, %c640], %26 {strides = array<i32>} : memref<32x768xbf16, #tpu.memory_space<vmem>>, vector<32x128xbf16>,
    } else {
    }
    %c0_i32_4 = arith.constant 0 : i32
    %13 = arith.cmpi eq, %arg1, %c0_i32_4 : i32
    %14 = arith.extui %13 : i1 to i32
    %c0_i32_5 = arith.constant 0 : i32
    %15 = arith.cmpi ne, %14, %c0_i32_5 : i32
    scf.if %15 {
      %c0_8 = arith.constant 0 : index
      %c0_9 = arith.constant 0 : index
      %22 = vector.load %arg5[%c0_8, %c0_9] : memref<32x16xbf16, #tpu.memory_space<vmem>>, vector<32x16xbf16>
      %c0_10 = arith.constant 0 : index
      %c0_11 = arith.constant 0 : index
      %c0_12 = arith.constant 0 : index
      %23 = vector.load %arg3[%c0_10, %c0_11, %c0_12] : memref<1x16x128xbf16, #tpu.memory_space<vmem>>, vector<1x16x128xbf16>
      %24 = vector.shape_cast %23 : vector<1x16x128xbf16> to vector<16x128xbf16>
      %cst = arith.constant dense<0.000000e+00> : vector<32x128xf32>
      %25 = tpu.matmul %22, %24, %cst {dimension_numbers = #tpu.dot_dimension_numbers<[1], [0], [0], [1], [0, 0, 1, 1], [], []>} : vector<32x16xbf16>, vector<16x128xbf16>, vector<32x128xf32> -> vector<32x128xf32>
      %c0_13 = arith.constant 0 : index
      %c0_14 = arith.constant 0 : index
      %c0_15 = arith.constant 0 : index
      %26 = vector.load %arg4[%c0_13, %c0_14, %c0_15] : memref<1x32x1xf32, #tpu.memory_space<vmem>>, vector<1x32x1xf32>
      %27 = vector.shape_cast %26 : vector<1x32x1xf32> to vector<32x1xf32>
      %28 = vector.broadcast %27 : vector<32x1xf32> to vector<32x128xf32>
      %29 = arith.addf %25, %28 : vector<32x128xf32>
      %cst_16 = arith.constant 0.000000e+00 : f32
      %30 = vector.broadcast %cst_16 : f32 to vector<32x128xf32>
      %31 = arith.cmpf ogt, %29, %30 : vector<32x128xf32>
      %32 = vector.broadcast %0 : f32 to vector<32x128xf32>
      %33 = arith.mulf %29, %32 : vector<32x128xf32>
      %34 = arith.select %31, %29, %33 : vector<32x128xi1>, vector<32x128xf32>
      %c0_17 = arith.constant 0 : index
      %c0_18 = arith.constant 0 : index
      %35 = vector.load %arg13[%c0_17, %c0_18] : memref<4x1xf32, #tpu.memory_space<vmem>>, vector<1x1xf32>
      %36 = vector.shape_cast %34 : vector<32x128xf32> to vector<1x32x128xf32>
      %cst_19 = arith.constant dense<0.000000e+00> : vector<1xf32>
      %37 = vector.multi_reduction <add>, %36, %cst_19 [1, 2] : vector<1x32x128xf32> to vector<1xf32>
      %38 = vector.shape_cast %37 : vector<1xf32> to vector<1x1x1xf32>
      %39 = vector.extract %38[0, 0, 0] : f32 from vector<1x1x1xf32>
      %40 = vector.broadcast %39 : f32 to vector<1x1xf32>
      %41 = arith.addf %35, %40 : vector<1x1xf32>
      %c0_20 = arith.constant 0 : index
      %c0_21 = arith.constant 0 : index
      %42 = vector.load %arg13[%c0_20, %c0_21] : memref<4x1xf32, #tpu.memory_space<vmem>>, vector<1x1xf32>
      tpu.vector_store %arg13[%c0_20, %c0_21], %41 {strides = array<i32>} : memref<4x1xf32, #tpu.memory_space<vmem>>, vector<1x1xf32>,
      %c1_22 = arith.constant 1 : index
      %c0_23 = arith.constant 0 : index
      %43 = vector.load %arg13[%c1_22, %c0_23] : memref<4x1xf32, #tpu.memory_space<vmem>>, vector<1x1xf32>
      %44 = arith.mulf %34, %34 : vector<32x128xf32>
      %45 = vector.shape_cast %44 : vector<32x128xf32> to vector<1x32x128xf32>
      %cst_24 = arith.constant dense<0.000000e+00> : vector<1xf32>
      %46 = vector.multi_reduction <add>, %45, %cst_24 [1, 2] : vector<1x32x128xf32> to vector<1xf32>
      %47 = vector.shape_cast %46 : vector<1xf32> to vector<1x1x1xf32>
      %48 = vector.extract %47[0, 0, 0] : f32 from vector<1x1x1xf32>
      %49 = vector.broadcast %48 : f32 to vector<1x1xf32>
      %50 = arith.addf %43, %49 : vector<1x1xf32>
      %c1_25 = arith.constant 1 : index
      %c0_26 = arith.constant 0 : index
      %51 = vector.load %arg13[%c1_25, %c0_26] : memref<4x1xf32, #tpu.memory_space<vmem>>, vector<1x1xf32>
      tpu.vector_store %arg13[%c1_25, %c0_26], %50 {strides = array<i32>} : memref<4x1xf32, #tpu.memory_space<vmem>>, vector<1x1xf32>,
      %c128_i32 = arith.constant 128 : i32
      %52 = arith.muli %arg2, %c128_i32 : i32
      %c128_i32_27 = arith.constant 128 : i32
      %53 = arith.addi %c128_i32_27, %52 : i32
      %54 = tpu.assume_multiple %53, 128 : i32
      %55 = arith.truncf %34 : vector<32x128xf32> to vector<32x128xbf16>
      %c0_28 = arith.constant 0 : index
      %56 = arith.index_cast %54 : i32 to index
      %57 = vector.load %arg11[%c0_28, %56] : memref<32x768xbf16, #tpu.memory_space<vmem>>, vector<32x128xbf16>
      tpu.vector_store %arg11[%c0_28, %56], %55 {strides = array<i32>} : memref<32x768xbf16, #tpu.memory_space<vmem>>, vector<32x128xbf16>,
    } else {
    }
    %c1_i32 = arith.constant 1 : i32
    %16 = arith.cmpi eq, %arg1, %c1_i32 : i32
    %17 = arith.extui %16 : i1 to i32
    %c0_i32_6 = arith.constant 0 : i32
    %18 = arith.cmpi ne, %17, %c0_i32_6 : i32
    scf.if %18 {
      %c0_8 = arith.constant 0 : index
      %c0_9 = arith.constant 0 : index
      %22 = vector.load %arg13[%c0_8, %c0_9] : memref<4x1xf32, #tpu.memory_space<vmem>>, vector<1x1xf32>
      %c1_10 = arith.constant 1 : index
      %c0_11 = arith.constant 0 : index
      %23 = vector.load %arg13[%c1_10, %c0_11] : memref<4x1xf32, #tpu.memory_space<vmem>>, vector<1x1xf32>
      %cst = arith.constant 6.10351563E-5 : f32
      %24 = vector.broadcast %cst : f32 to vector<1x1xf32>
      %25 = arith.mulf %22, %24 : vector<1x1xf32>
      %26 = arith.mulf %22, %25 : vector<1x1xf32>
      %27 = arith.subf %23, %26 : vector<1x1xf32>
      %cst_12 = arith.constant 6.10388815E-5 : f32
      %28 = vector.broadcast %cst_12 : f32 to vector<1x1xf32>
      %29 = arith.mulf %27, %28 : vector<1x1xf32>
      %cst_13 = arith.constant 9.99999974E-6 : f32
      %30 = vector.broadcast %cst_13 : f32 to vector<1x1xf32>
      %31 = arith.addf %29, %30 : vector<1x1xf32>
      %32 = math.rsqrt %31 : vector<1x1xf32>
      %33 = vector.broadcast %32 : vector<1x1xf32> to vector<32x1xf32>
      %34 = arith.mulf %3, %33 : vector<32x1xf32>
      %35 = vector.broadcast %25 : vector<1x1xf32> to vector<32x1xf32>
      %36 = arith.mulf %35, %34 : vector<32x1xf32>
      %37 = arith.subf %4, %36 : vector<32x1xf32>
      %c128_i32 = arith.constant 128 : i32
      %38 = arith.muli %arg2, %c128_i32 : i32
      %39 = tpu.assume_multiple %38, 128 : i32
      %c0_14 = arith.constant 0 : index
      %40 = arith.index_cast %39 : i32 to index
      %41 = vector.load %arg11[%c0_14, %40] : memref<32x768xbf16, #tpu.memory_space<vmem>>, vector<32x384xbf16>
      %42 = arith.extf %41 : vector<32x384xbf16> to vector<32x384xf32>
      %43 = tpu.iota {dimensions = array<i32: 1>} : vector<1x384xi32>
      %c128_i32_15 = arith.constant 128 : i32
      %44 = arith.muli %arg2, %c128_i32_15 : i32
      %c128_i32_16 = arith.constant 128 : i32
      %45 = arith.subi %44, %c128_i32_16 : i32
      %46 = vector.broadcast %45 : i32 to vector<1x384xi32>
      %47 = arith.addi %43, %46 : vector<1x384xi32>
      %c0_i32_17 = arith.constant 0 : i32
      %48 = vector.broadcast %c0_i32_17 : i32 to vector<1x384xi32>
      %49 = arith.cmpi sge, %47, %48 : vector<1x384xi32>
      %c512_i32 = arith.constant 512 : i32
      %50 = vector.broadcast %c512_i32 : i32 to vector<1x384xi32>
      %51 = arith.cmpi slt, %47, %50 : vector<1x384xi32>
      %52 = arith.andi %49, %51 : vector<1x384xi1>
      %53 = vector.broadcast %34 : vector<32x1xf32> to vector<32x384xf32>
      %54 = arith.mulf %42, %53 : vector<32x384xf32>
      %55 = vector.broadcast %37 : vector<32x1xf32> to vector<32x384xf32>
      %56 = arith.addf %54, %55 : vector<32x384xf32>
      %cst_18 = arith.constant 0.000000e+00 : f32
      %57 = vector.shape_cast %52 : vector<1x384xi1> to vector<1x384xi1>
      %58 = vector.broadcast %57 : vector<1x384xi1> to vector<32x384xi1>
      %59 = vector.broadcast %cst_18 : f32 to vector<32x384xf32>
      %60 = arith.select %58, %56, %59 : vector<32x384xi1>, vector<32x384xf32>
      %61 = vector.extract_strided_slice %60 {offsets = [0, 126], sizes = [32, 128], strides = [1, 1]} : vector<32x384xf32> to vector<32x128xf32>
      %62 = vector.extract_strided_slice %2 {offsets = [0, 5], sizes = [32, 1], strides = [1, 1]} : vector<32x8xf32> to vector<32x1xf32>
      %63 = vector.broadcast %62 : vector<32x1xf32> to vector<32x128xf32>
      %64 = arith.mulf %63, %61 : vector<32x128xf32>
      %65 = vector.extract_strided_slice %60 {offsets = [0, 128], sizes = [32, 128], strides = [1, 1]} : vector<32x384xf32> to vector<32x128xf32>
      %66 = vector.extract_strided_slice %2 {offsets = [0, 6], sizes = [32, 1], strides = [1, 1]} : vector<32x8xf32> to vector<32x1xf32>
      %67 = vector.broadcast %66 : vector<32x1xf32> to vector<32x128xf32>
      %68 = arith.mulf %67, %65 : vector<32x128xf32>
      %69 = arith.addf %64, %68 : vector<32x128xf32>
      %70 = vector.extract_strided_slice %60 {offsets = [0, 130], sizes = [32, 128], strides = [1, 1]} : vector<32x384xf32> to vector<32x128xf32>
      %71 = vector.extract_strided_slice %2 {offsets = [0, 7], sizes = [32, 1], strides = [1, 1]} : vector<32x8xf32> to vector<32x1xf32>
      %72 = vector.broadcast %71 : vector<32x1xf32> to vector<32x128xf32>
      %73 = arith.mulf %72, %70 : vector<32x128xf32>
      %74 = arith.addf %69, %73 : vector<32x128xf32>
      %75 = vector.broadcast %7 : vector<32x1xf32> to vector<32x128xf32>
      %76 = arith.addf %74, %75 : vector<32x128xf32>
      %cst_19 = arith.constant 0.000000e+00 : f32
      %77 = vector.broadcast %cst_19 : f32 to vector<32x128xf32>
      %78 = arith.cmpf ogt, %76, %77 : vector<32x128xf32>
      %79 = vector.broadcast %1 : f32 to vector<32x128xf32>
      %80 = arith.mulf %76, %79 : vector<32x128xf32>
      %81 = arith.select %78, %76, %80 : vector<32x128xi1>, vector<32x128xf32>
      %c2 = arith.constant 2 : index
      %c0_20 = arith.constant 0 : index
      %82 = vector.load %arg13[%c2, %c0_20] : memref<4x1xf32, #tpu.memory_space<vmem>>, vector<1x1xf32>
      %83 = vector.shape_cast %81 : vector<32x128xf32> to vector<1x32x128xf32>
      %cst_21 = arith.constant dense<0.000000e+00> : vector<1xf32>
      %84 = vector.multi_reduction <add>, %83, %cst_21 [1, 2] : vector<1x32x128xf32> to vector<1xf32>
      %85 = vector.shape_cast %84 : vector<1xf32> to vector<1x1x1xf32>
      %86 = vector.extract %85[0, 0, 0] : f32 from vector<1x1x1xf32>
      %87 = vector.broadcast %86 : f32 to vector<1x1xf32>
      %88 = arith.addf %82, %87 : vector<1x1xf32>
      %c2_22 = arith.constant 2 : index
      %c0_23 = arith.constant 0 : index
      %89 = vector.load %arg13[%c2_22, %c0_23] : memref<4x1xf32, #tpu.memory_space<vmem>>, vector<1x1xf32>
      tpu.vector_store %arg13[%c2_22, %c0_23], %88 {strides = array<i32>} : memref<4x1xf32, #tpu.memory_space<vmem>>, vector<1x1xf32>,
      %c3 = arith.constant 3 : index
      %c0_24 = arith.constant 0 : index
      %90 = vector.load %arg13[%c3, %c0_24] : memref<4x1xf32, #tpu.memory_space<vmem>>, vector<1x1xf32>
      %91 = arith.mulf %81, %81 : vector<32x128xf32>
      %92 = vector.shape_cast %91 : vector<32x128xf32> to vector<1x32x128xf32>
      %cst_25 = arith.constant dense<0.000000e+00> : vector<1xf32>
      %93 = vector.multi_reduction <add>, %92, %cst_25 [1, 2] : vector<1x32x128xf32> to vector<1xf32>
      %94 = vector.shape_cast %93 : vector<1xf32> to vector<1x1x1xf32>
      %95 = vector.extract %94[0, 0, 0] : f32 from vector<1x1x1xf32>
      %96 = vector.broadcast %95 : f32 to vector<1x1xf32>
      %97 = arith.addf %90, %96 : vector<1x1xf32>
      %c3_26 = arith.constant 3 : index
      %c0_27 = arith.constant 0 : index
      %98 = vector.load %arg13[%c3_26, %c0_27] : memref<4x1xf32, #tpu.memory_space<vmem>>, vector<1x1xf32>
      tpu.vector_store %arg13[%c3_26, %c0_27], %97 {strides = array<i32>} : memref<4x1xf32, #tpu.memory_space<vmem>>, vector<1x1xf32>,
      %c128_i32_28 = arith.constant 128 : i32
      %99 = arith.muli %arg2, %c128_i32_28 : i32
      %100 = tpu.assume_multiple %99, 128 : i32
      %101 = arith.truncf %81 : vector<32x128xf32> to vector<32x128xbf16>
      %c0_29 = arith.constant 0 : index
      %102 = arith.index_cast %100 : i32 to index
      %103 = vector.load %arg12[%c0_29, %102] : memref<32x512xbf16, #tpu.memory_space<vmem>>, vector<32x128xbf16>
      tpu.vector_store %arg12[%c0_29, %102], %101 {strides = array<i32>} : memref<32x512xbf16, #tpu.memory_space<vmem>>, vector<32x128xbf16>,
    } else {
    }
    %c2_i32 = arith.constant 2 : i32
    %19 = arith.cmpi eq, %arg1, %c2_i32 : i32
    %20 = arith.extui %19 : i1 to i32
    %c0_i32_7 = arith.constant 0 : i32
    %21 = arith.cmpi ne, %20, %c0_i32_7 : i32
    scf.if %21 {
      %c2 = arith.constant 2 : index
      %c0_8 = arith.constant 0 : index
      %22 = vector.load %arg13[%c2, %c0_8] : memref<4x1xf32, #tpu.memory_space<vmem>>, vector<1x1xf32>
      %c3 = arith.constant 3 : index
      %c0_9 = arith.constant 0 : index
      %23 = vector.load %arg13[%c3, %c0_9] : memref<4x1xf32, #tpu.memory_space<vmem>>, vector<1x1xf32>
      %cst = arith.constant 6.10351563E-5 : f32
      %24 = vector.broadcast %cst : f32 to vector<1x1xf32>
      %25 = arith.mulf %22, %24 : vector<1x1xf32>
      %26 = arith.mulf %22, %25 : vector<1x1xf32>
      %27 = arith.subf %23, %26 : vector<1x1xf32>
      %cst_10 = arith.constant 6.10388815E-5 : f32
      %28 = vector.broadcast %cst_10 : f32 to vector<1x1xf32>
      %29 = arith.mulf %27, %28 : vector<1x1xf32>
      %cst_11 = arith.constant 9.99999974E-6 : f32
      %30 = vector.broadcast %cst_11 : f32 to vector<1x1xf32>
      %31 = arith.addf %29, %30 : vector<1x1xf32>
      %32 = math.rsqrt %31 : vector<1x1xf32>
      %33 = vector.broadcast %32 : vector<1x1xf32> to vector<32x1xf32>
      %34 = arith.mulf %5, %33 : vector<32x1xf32>
      %35 = vector.broadcast %25 : vector<1x1xf32> to vector<32x1xf32>
      %36 = arith.mulf %35, %34 : vector<32x1xf32>
      %37 = arith.subf %6, %36 : vector<32x1xf32>
      %c128_i32 = arith.constant 128 : i32
      %38 = arith.muli %arg2, %c128_i32 : i32
      %39 = tpu.assume_multiple %38, 128 : i32
      %c0_12 = arith.constant 0 : index
      %40 = arith.index_cast %39 : i32 to index
      %41 = vector.load %arg12[%c0_12, %40] : memref<32x512xbf16, #tpu.memory_space<vmem>>, vector<32x128xbf16>
      %42 = arith.extf %41 : vector<32x128xbf16> to vector<32x128xf32>
      %43 = vector.broadcast %34 : vector<32x1xf32> to vector<32x128xf32>
      %44 = arith.mulf %42, %43 : vector<32x128xf32>
      %45 = vector.broadcast %37 : vector<32x1xf32> to vector<32x128xf32>
      %46 = arith.addf %44, %45 : vector<32x128xf32>
      %c0_13 = arith.constant 0 : index
      %c0_14 = arith.constant 0 : index
      %47 = vector.load %arg6[%c0_13, %c0_14] : memref<16x32xbf16, #tpu.memory_space<vmem>>, vector<16x32xbf16>
      %48 = arith.truncf %46 : vector<32x128xf32> to vector<32x128xbf16>
      %cst_15 = arith.constant dense<0.000000e+00> : vector<16x128xf32>
      %49 = tpu.matmul %47, %48, %cst_15 {dimension_numbers = #tpu.dot_dimension_numbers<[1], [0], [0], [1], [0, 0, 1, 1], [], []>} : vector<16x32xbf16>, vector<32x128xbf16>, vector<16x128xf32> -> vector<16x128xf32>
      %c0_16 = arith.constant 0 : index
      %c0_17 = arith.constant 0 : index
      %50 = vector.load %arg7[%c0_16, %c0_17] : memref<16x1xf32, #tpu.memory_space<vmem>>, vector<16x1xf32>
      %51 = vector.broadcast %50 : vector<16x1xf32> to vector<16x128xf32>
      %52 = arith.addf %49, %51 : vector<16x128xf32>
      %c0_18 = arith.constant 0 : index
      %c0_19 = arith.constant 0 : index
      %c0_20 = arith.constant 0 : index
      %53 = vector.load %arg3[%c0_18, %c0_19, %c0_20] : memref<1x16x128xbf16, #tpu.memory_space<vmem>>, vector<1x16x128xbf16>
      %54 = vector.shape_cast %53 : vector<1x16x128xbf16> to vector<16x128xbf16>
      %55 = arith.extf %54 : vector<16x128xbf16> to vector<16x128xf32>
      %56 = arith.addf %52, %55 : vector<16x128xf32>
      %57 = arith.truncf %56 : vector<16x128xf32> to vector<16x128xbf16>
      %c0_21 = arith.constant 0 : index
      %c0_22 = arith.constant 0 : index
      %c0_23 = arith.constant 0 : index
      %58 = vector.load %arg10[%c0_21, %c0_22, %c0_23] : memref<1x16x128xbf16, #tpu.memory_space<vmem>>, vector<1x16x128xbf16>
      %59 = vector.shape_cast %58 : vector<1x16x128xbf16> to vector<16x128xbf16>
      %60 = vector.shape_cast %57 : vector<16x128xbf16> to vector<1x16x128xbf16>
      tpu.vector_store %arg10[%c0_21, %c0_22, %c0_23], %60 {strides = array<i32>} : memref<1x16x128xbf16, #tpu.memory_space<vmem>>, vector<1x16x128xbf16>,
    } else {
    }
    return
  }
  func.func @transform_0(%arg0: i32, %arg1: i32, %arg2: i32) -> (i32, i32, i32) {
    %c1_i32 = arith.constant 1 : i32
    %0 = arith.cmpi eq, %arg1, %c1_i32 : i32
    %c3_i32 = arith.constant 3 : i32
    %1 = arith.select %0, %c3_i32, %arg2 : i32
    %c0_i32 = arith.constant 0 : i32
    %c0_i32_0 = arith.constant 0 : i32
    return %arg0, %c0_i32, %1 : i32, i32, i32
  }
  func.func @transform_1(%arg0: i32, %arg1: i32, %arg2: i32) -> (i32, i32, i32) {
    %c0_i32 = arith.constant 0 : i32
    %c0_i32_0 = arith.constant 0 : i32
    %c0_i32_1 = arith.constant 0 : i32
    return %arg0, %c0_i32, %c0_i32_0 : i32, i32, i32
  }
  func.func @transform_2(%arg0: i32, %arg1: i32, %arg2: i32) -> (i32, i32) {
    %c0_i32 = arith.constant 0 : i32
    %c0_i32_0 = arith.constant 0 : i32
    %c0_i32_1 = arith.constant 0 : i32
    return %c0_i32, %c0_i32_0 : i32, i32
  }
  func.func @transform_3(%arg0: i32, %arg1: i32, %arg2: i32) -> (i32, i32) {
    %c0_i32 = arith.constant 0 : i32
    %c0_i32_0 = arith.constant 0 : i32
    %c0_i32_1 = arith.constant 0 : i32
    return %c0_i32, %c0_i32_0 : i32, i32
  }
  func.func @transform_4(%arg0: i32, %arg1: i32, %arg2: i32) -> (i32, i32) {
    %c0_i32 = arith.constant 0 : i32
    %c0_i32_0 = arith.constant 0 : i32
    %c0_i32_1 = arith.constant 0 : i32
    return %c0_i32, %c0_i32_0 : i32, i32
  }
  func.func @transform_5(%arg0: i32, %arg1: i32, %arg2: i32) -> (i32, i32) {
    %c0_i32 = arith.constant 0 : i32
    %c0_i32_0 = arith.constant 0 : i32
    %c0_i32_1 = arith.constant 0 : i32
    return %c0_i32, %c0_i32_0 : i32, i32
  }
  func.func @transform_6(%arg0: i32, %arg1: i32, %arg2: i32) -> i32 {
    %c0_i32 = arith.constant 0 : i32
    %c0_i32_0 = arith.constant 0 : i32
    return %c0_i32 : i32
  }
  func.func @transform_7(%arg0: i32, %arg1: i32, %arg2: i32) -> (i32, i32, i32) {
    %c2_i32 = arith.constant 2 : i32
    %0 = arith.cmpi eq, %arg1, %c2_i32 : i32
    %c0_i32 = arith.constant 0 : i32
    %1 = arith.select %0, %arg2, %c0_i32 : i32
    %c0_i32_0 = arith.constant 0 : i32
    %c0_i32_1 = arith.constant 0 : i32
    return %arg0, %c0_i32_0, %1 : i32, i32, i32
  }
}

</mosaic_0001>

<llo_original>
// kernel: tpu_custom_call.1
$region0: #{tpu_custom_call.1}
  #allocation0 [shape = 'u32[]', space=smem, size = 0x4, offset = 0x4, fixed_abs, tag = 'smem constant byte address 0x4 - core index']
  #allocation1 [shape = 'u32[144,128]{1,0:T(1,128)}', space=vmem, size = 0x12000, scoped, tag = 'internal scratch']
  #allocation2 [shape = 'bf16[32,768]{1,0:T(16,128)(2,1)}', space=vmem, size = 0xc000, scoped, tag = 'scratch operand']
  #allocation3 [shape = 'bf16[32,512]{1,0:T(16,128)(2,1)}', space=vmem, size = 0x8000, scoped, tag = 'scratch operand']
  #allocation4 [shape = 'f32[4,1]{1,0:T(4,128)}', space=vmem, size = 0x800, scoped, tag = 'scratch operand']
  %s0 = inlined_call_operand.vmem [shape: bf16[2,16,512], index: 0, kind: input, shape index: {}]
  %s1 = inlined_call_operand.vmem [shape: f32[2,32,1], index: 1, kind: input, shape index: {}]
  %s2 = inlined_call_operand.vmem [shape: bf16[32,16], index: 2, kind: input, shape index: {}]
  %s3 = inlined_call_operand.vmem [shape: bf16[16,32], index: 3, kind: input, shape index: {}]
  %s4 = inlined_call_operand.vmem [shape: f32[16,1], index: 4, kind: input, shape index: {}]
  %s5 = inlined_call_operand.vmem [shape: f32[32,8], index: 5, kind: input, shape index: {}]
  %s6 = inlined_call_operand.vmem [shape: f32[2], index: 6, kind: input, shape index: {}]
  %s7 = inlined_call_operand.hbm [shape: bf16[2,16,512], index: 7, kind: output, shape index: {}]
  %s8 = sld [smem:[#allocation0]]
  $region122: #{tpu_custom_call.1} parent=0
    _
  %s10 = ssub.s32 1, %s8
  %s11 = scalar_select 0, %s10, %s8
  $region1: #{tpu_custom_call.1} parent=0
    #allocation5 [shape = 'u8[8192]{0}', space=vmem, size = 0x2000, scoped, tag = 'input window, operand 0']
    #allocation6 [shape = 'u8[512]{0}', space=smem, size = 0x200, scoped, tag = 'input window, operand 6, single buffered']
    #allocation7 [shape = 's32[2]{0}', space=sflag, size = 0x8, scoped, tag = 'scoped memory for tpu_custom_call.1']
    #allocation8 [shape = 's32[2]{0}', space=sflag, size = 0x8, scoped, tag = 'scoped memory for tpu_custom_call.1']
    #allocation9 [shape = 'u8[8192]{0}', space=vmem, size = 0x2000, scoped, tag = 'output window, operand 0']
    %12 = vsyncpa [#allocation8], 0
    %13 = vsyncpa [#allocation7], 0
    %s14 = scalar_lea.sflag [#allocation7], 1
    %15 = vsyncpa %s14, 0
    loop: start=0, step=1, limit=26
    $region2: #{tpu_custom_call.1} parent=1 // loop_pre_header
      _
    $region3: #{tpu_custom_call.1} parent=1 // loop_header
      %s17 = sphi 0, %s21
      %p18 = scmp.ge.s32.totalorder %s17, 26
      %s24 = sphi 0, %s43
      %s25 = sphi 0, %s39
      %s26 = sphi 0, %s35
      %s27 = sphi 0, %s24
      %s28 = sphi 0, %s25
      %s29 = sphi 0, %s26
      %s30 = sphi 0, %s27
      %s31 = sphi 0, %s28
      %s32 = sphi 0, %s29
      %s52 = sphi 0, %s54
      %s55 = sphi 0, %s52
      %s56 = sphi 0, %s55
      %s72 = sphi 0, %s56
      %s78 = sphi 0, %s80
      %s81 = sphi 0, %s78
      %s82 = sphi 0, %s81
      %s98 = sphi 0, %s82
      %s102 = sphi 0, %s102
      %s104 = sphi 0, %s102
      %s105 = sphi 0, %s104
      %s119 = sphi 0, %s105
      %s123 = sphi 0, %s123
      %s125 = sphi 0, %s123
      %s126 = sphi 0, %s125
      %s140 = sphi 0, %s126
      %s144 = sphi 0, %s144
      %s146 = sphi 0, %s144
      %s147 = sphi 0, %s146
      %s161 = sphi 0, %s147
      %s165 = sphi 0, %s165
      %s167 = sphi 0, %s165
      %s168 = sphi 0, %s167
      %s182 = sphi 0, %s168
      %s186 = sphi 0, %s186
      %s188 = sphi 0, %s186
      %s189 = sphi 0, %s188
      %s203 = sphi 0, %s189
      %s215 = sphi 0, %s217
      %s218 = sphi 0, %s215
      %s219 = sphi 0, %s218
      %s235 = sphi 0, %s219
    $region4: #{tpu_custom_call.1} parent=1 // loop_header_branch
      %20 = sbr.rel (%p18) target = $region8
    $region5: #{tpu_custom_call.1} parent=1 // loop_body
      %s22 = ssub.s32 %s17, 1
      %s23 = ssub.s32 %s17, 2
      %s33 = sadd.s32 1, %s26
      %p34 = scmp.ge.s32.totalorder %s33, 4
      %s35 = scalar_select %p34, 0, %s33
      %s36 = sadd.s32 1, %s25
      %s37 = scalar_select %p34, %s36, %s25
      %p38 = scmp.ge.s32.totalorder %s37, 3
      %s39 = scalar_select %p38, 0, %s37
      %s40 = sadd.s32 1, %s24
      %s41 = scalar_select %p38, %s40, %s24
      %p42 = scmp.ge.s32.totalorder %s41, 2
      %s43 = scalar_select %p42, 0, %s41
      %p44 = scmp.eq.s32.totalorder %s25, 1
      %s45 = scalar_select %p44, 3, %s26
      %p46 = scmp.eq.s32.totalorder %s39, 1
      %s47 = scalar_select %p46, 3, %s35
      %s48 = ssub.s32 %s24, %s43
      %s49 = ssub.s32 %s45, %s47
      %s50 = sor.u32 %s48, %s49
      %p51 = scmp.eq.s32.totalorder %s50, 0
      %s53 = sadd.s32 %s52, 1
      %s54 = scalar_select %p51, %s52, %s53
      %p57 = pneg %p51
      %p58 = scmp.eq.s32.totalorder %s17, 23
      %p59 = por %p57, %p58
      %p60 = scmp.ne.s32.totalorder %s52, %s55
      %p61 = scmp.eq.s32.totalorder %s17, 0
      %p62 = por %p60, %p61
      %p63 = scmp.ne.s32.totalorder %s52, %s55
      %p64 = scmp.eq.s32.totalorder %s22, 23
      %p65 = por %p63, %p64
      %p66 = scmp.ne.s32.totalorder %s55, %s56
      %p67 = scmp.eq.s32.totalorder %s22, 0
      %p68 = por %p66, %p67
      %p69 = scmp.ne.s32.totalorder %s55, %s56
      %p70 = scmp.eq.s32.totalorder %s23, 23
      %p71 = por %p69, %p70
      %p73 = scmp.ne.s32.totalorder %s56, %s72
      %p74 = scmp.eq.s32.totalorder %s23, 0
      %p75 = por %p73, %p74
      %s76 = ssub.s32 %s24, %s43
      %p77 = scmp.eq.s32.totalorder %s76, 0
      %s79 = sadd.s32 %s78, 1
      %s80 = scalar_select %p77, %s78, %s79
      %p83 = pneg %p77
      %p84 = scmp.eq.s32.totalorder %s17, 23
      %p85 = por %p83, %p84
      %p86 = scmp.ne.s32.totalorder %s78, %s81
      %p87 = scmp.eq.s32.totalorder %s17, 0
      %p88 = por %p86, %p87
      %p89 = scmp.ne.s32.totalorder %s78, %s81
      %p90 = scmp.eq.s32.totalorder %s22, 23
      %p91 = por %p89, %p90
      %p92 = scmp.ne.s32.totalorder %s81, %s82
      %p93 = scmp.eq.s32.totalorder %s22, 0
      %p94 = por %p92, %p93
      %p95 = scmp.ne.s32.totalorder %s81, %s82
      %p96 = scmp.eq.s32.totalorder %s23, 23
      %p97 = por %p95, %p96
      %p99 = scmp.ne.s32.totalorder %s82, %s98
      %p100 = scmp.eq.s32.totalorder %s23, 0
      %p101 = por %p99, %p100
      %s103 = sadd.s32 %s102, 1
      %p106 = scmp.eq.s32.totalorder %s17, 23
      %p107 = scmp.ne.s32.totalorder %s102, %s104
      %p108 = scmp.eq.s32.totalorder %s17, 0
      %p109 = por %p107, %p108
      %p110 = scmp.ne.s32.totalorder %s102, %s104
      %p111 = scmp.eq.s32.totalorder %s22, 23
      %p112 = por %p110, %p111
      %p113 = scmp.ne.s32.totalorder %s104, %s105
      %p114 = scmp.eq.s32.totalorder %s22, 0
      %p115 = por %p113, %p114
      %p116 = scmp.ne.s32.totalorder %s104, %s105
      %p117 = scmp.eq.s32.totalorder %s23, 23
      %p118 = por %p116, %p117
      %p120 = scmp.ne.s32.totalorder %s105, %s119
      %p121 = scmp.eq.s32.totalorder %s23, 0
      %p122 = por %p120, %p121
      %s124 = sadd.s32 %s123, 1
      %p127 = scmp.eq.s32.totalorder %s17, 23
      %p128 = scmp.ne.s32.totalorder %s123, %s125
      %p129 = scmp.eq.s32.totalorder %s17, 0
      %p130 = por %p128, %p129
      %p131 = scmp.ne.s32.totalorder %s123, %s125
      %p132 = scmp.eq.s32.totalorder %s22, 23
      %p133 = por %p131, %p132
      %p134 = scmp.ne.s32.totalorder %s125, %s126
      %p135 = scmp.eq.s32.totalorder %s22, 0
      %p136 = por %p134, %p135
      %p137 = scmp.ne.s32.totalorder %s125, %s126
      %p138 = scmp.eq.s32.totalorder %s23, 23
      %p139 = por %p137, %p138
      %p141 = scmp.ne.s32.totalorder %s126, %s140
      %p142 = scmp.eq.s32.totalorder %s23, 0
      %p143 = por %p141, %p142
      %s145 = sadd.s32 %s144, 1
      %p148 = scmp.eq.s32.totalorder %s17, 23
      %p149 = scmp.ne.s32.totalorder %s144, %s146
      %p150 = scmp.eq.s32.totalorder %s17, 0
      %p151 = por %p149, %p150
      %p152 = scmp.ne.s32.totalorder %s144, %s146
      %p153 = scmp.eq.s32.totalorder %s22, 23
      %p154 = por %p152, %p153
      %p155 = scmp.ne.s32.totalorder %s146, %s147
      %p156 = scmp.eq.s32.totalorder %s22, 0
      %p157 = por %p155, %p156
      %p158 = scmp.ne.s32.totalorder %s146, %s147
      %p159 = scmp.eq.s32.totalorder %s23, 23
      %p160 = por %p158, %p159
      %p162 = scmp.ne.s32.totalorder %s147, %s161
      %p163 = scmp.eq.s32.totalorder %s23, 0
      %p164 = por %p162, %p163
      %s166 = sadd.s32 %s165, 1
      %p169 = scmp.eq.s32.totalorder %s17, 23
      %p170 = scmp.ne.s32.totalorder %s165, %s167
      %p171 = scmp.eq.s32.totalorder %s17, 0
      %p172 = por %p170, %p171
      %p173 = scmp.ne.s32.totalorder %s165, %s167
      %p174 = scmp.eq.s32.totalorder %s22, 23
      %p175 = por %p173, %p174
      %p176 = scmp.ne.s32.totalorder %s167, %s168
      %p177 = scmp.eq.s32.totalorder %s22, 0
      %p178 = por %p176, %p177
      %p179 = scmp.ne.s32.totalorder %s167, %s168
      %p180 = scmp.eq.s32.totalorder %s23, 23
      %p181 = por %p179, %p180
      %p183 = scmp.ne.s32.totalorder %s168, %s182
      %p184 = scmp.eq.s32.totalorder %s23, 0
      %p185 = por %p183, %p184
      %s187 = sadd.s32 %s186, 1
      %p190 = scmp.eq.s32.totalorder %s17, 23
      %p191 = scmp.ne.s32.totalorder %s186, %s188
      %p192 = scmp.eq.s32.totalorder %s17, 0
      %p193 = por %p191, %p192
      %p194 = scmp.ne.s32.totalorder %s186, %s188
      %p195 = scmp.eq.s32.totalorder %s22, 23
      %p196 = por %p194, %p195
      %p197 = scmp.ne.s32.totalorder %s188, %s189
      %p198 = scmp.eq.s32.totalorder %s22, 0
      %p199 = por %p197, %p198
      %p200 = scmp.ne.s32.totalorder %s188, %s189
      %p201 = scmp.eq.s32.totalorder %s23, 23
      %p202 = por %p200, %p201
      %p204 = scmp.ne.s32.totalorder %s189, %s203
      %p205 = scmp.eq.s32.totalorder %s23, 0
      %p206 = por %p204, %p205
      %p207 = scmp.eq.s32.totalorder %s25, 2
      %s208 = scalar_select %p207, %s26, 0
      %p209 = scmp.eq.s32.totalorder %s39, 2
      %s210 = scalar_select %p209, %s35, 0
      %s211 = ssub.s32 %s24, %s43
      %s212 = ssub.s32 %s208, %s210
      %s213 = sor.u32 %s211, %s212
      %p214 = scmp.eq.s32.totalorder %s213, 0
      %s216 = sadd.s32 %s215, 1
      %s217 = scalar_select %p214, %s215, %s216
      %p220 = pneg %p214
      %p221 = scmp.eq.s32.totalorder %s17, 23
      %p222 = por %p220, %p221
      %p223 = scmp.ne.s32.totalorder %s215, %s218
      %p224 = scmp.eq.s32.totalorder %s17, 0
      %p225 = por %p223, %p224
      %p226 = scmp.ne.s32.totalorder %s215, %s218
      %p227 = scmp.eq.s32.totalorder %s22, 23
      %p228 = por %p226, %p227
      %p229 = scmp.ne.s32.totalorder %s218, %s219
      %p230 = scmp.eq.s32.totalorder %s22, 0
      %p231 = por %p229, %p230
      %p232 = scmp.ne.s32.totalorder %s218, %s219
      %p233 = scmp.eq.s32.totalorder %s23, 23
      %p234 = por %p232, %p233
      %p236 = scmp.ne.s32.totalorder %s219, %s235
      %p237 = scmp.eq.s32.totalorder %s23, 0
      %p238 = por %p236, %p237
      %p239 = scmp.le.s32.totalorder 1, %s17
      %p240 = scmp.lt.s32.totalorder %s17, 25
      %p241 = pnand %p239, %p240
      %p242 = pneg %p241
      // Predicated region
      $region9: #{tpu_custom_call.1} parent=5 // pred_check
        _
      $region10: #{tpu_custom_call.1} parent=5 // pred_check_branch
        %244 = sbr.rel (%p241) target = $region12
      $region11: #{tpu_custom_call.1} parent=5 // pred_region
        %s245 = ssub.s32 %s17, 1
        // Predicated region
        $region13: #{tpu_custom_call.1} parent=11 // pred_check
          %p246 = pneg %p115
        $region14: #{tpu_custom_call.1} parent=11 // pred_check_branch
          %248 = sbr.rel (%p246) target = $region16
        $region15: #{tpu_custom_call.1} parent=11 // pred_region
          _
        $region16: #{tpu_custom_call.1} parent=11 // pred_fallthru
          _
        // Predicated region
        $region17: #{tpu_custom_call.1} parent=11 // pred_check
          %p249 = pneg %p136
        $region18: #{tpu_custom_call.1} parent=11 // pred_check_branch
          %251 = sbr.rel (%p249) target = $region20
        $region19: #{tpu_custom_call.1} parent=11 // pred_region
          _
        $region20: #{tpu_custom_call.1} parent=11 // pred_fallthru
          _
        // Predicated region
        $region21: #{tpu_custom_call.1} parent=11 // pred_check
          %p252 = pneg %p157
        $region22: #{tpu_custom_call.1} parent=11 // pred_check_branch
          %254 = sbr.rel (%p252) target = $region24
        $region23: #{tpu_custom_call.1} parent=11 // pred_region
          _
        $region24: #{tpu_custom_call.1} parent=11 // pred_fallthru
          _
        // Predicated region
        $region25: #{tpu_custom_call.1} parent=11 // pred_check
          %p255 = pneg %p178
        $region26: #{tpu_custom_call.1} parent=11 // pred_check_branch
          %257 = sbr.rel (%p255) target = $region28
        $region27: #{tpu_custom_call.1} parent=11 // pred_region
          _
        $region28: #{tpu_custom_call.1} parent=11 // pred_fallthru
          _
        // Predicated region
        $region29: #{tpu_custom_call.1} parent=11 // pred_check
          %p258 = pneg %p199
        $region30: #{tpu_custom_call.1} parent=11 // pred_check_branch
          %260 = sbr.rel (%p258) target = $region32
        $region31: #{tpu_custom_call.1} parent=11 // pred_region
          %s262 = ssub.s32 16, 16
          %263 = vsyncadd [#allocation8], %s262
          %s265 = sshll.u32 %s6, 4
          %s266 = int_to_ptr.vmem [resolvable:$true] %s265
          %268 = dma.vmem_to_smem %s266, 16, [#allocation6], [#allocation8]
        $region32: #{tpu_custom_call.1} parent=11 // pred_fallthru
          _
      $region12: #{tpu_custom_call.1} parent=5 // pred_fallthru
        _
      %p269 = scmp.lt.s32.totalorder %s17, 24
      // Predicated region
      $region33: #{tpu_custom_call.1} parent=5 // pred_check
        %p270 = pneg %p269
      $region34: #{tpu_custom_call.1} parent=5 // pred_check_branch
        %272 = sbr.rel (%p270) target = $region36
      $region35: #{tpu_custom_call.1} parent=5 // pred_region
        // Predicated region
        $region37: #{tpu_custom_call.1} parent=35 // pred_check
          %p273 = pneg %p62
        $region38: #{tpu_custom_call.1} parent=35 // pred_check_branch
          %275 = sbr.rel (%p273) target = $region40
        $region39: #{tpu_custom_call.1} parent=35 // pred_region
          %s276 = sand.u32 %s52, 1
          %s277 = sand.u32 %s52, 1
          %s278 = smul.addr %s277, 8
          %s279 = scalar_lea.vmem [#allocation5], %s278
          %p280 = scmp.eq.s32.totalorder %s25, 1
          %s281 = scalar_select %p280, 3, %s26
          %s282 = smul.addr %s24, 8
          %s283 = sadd.s32 %s281, %s282
          %s284 = smul.addr %s283, 4
          %s285 = scalar_lea.vmem %s0, %s284
          // Predicated region
          $region41: #{tpu_custom_call.1} parent=39 // pred_check
            _
          $region42: #{tpu_custom_call.1} parent=39 // pred_check_branch
            %287 = sbr.rel (0) target = $region44
          $region43: #{tpu_custom_call.1} parent=39 // pred_region
            // Predicated region
            $region45: #{tpu_custom_call.1} parent=43 // pred_check
              _
            $region46: #{tpu_custom_call.1} parent=43 // pred_check_branch
              %289 = sbr.rel target = $region48
            $region47: #{tpu_custom_call.1} parent=43 // pred_region
              // Predicated region
              $region60: #{tpu_custom_call.1} parent=47 // pred_check
                _
              $region61: #{tpu_custom_call.1} parent=47 // pred_check_branch
                %306 = sbr.rel (0) target = $region63
              $region62: #{tpu_custom_call.1} parent=47 // pred_region
                loop: start=0, step=1, limit=1
                $region64: #{tpu_custom_call.1} parent=62 // loop_pre_header
                  _
                $region65: #{tpu_custom_call.1} parent=62 // loop_header
                  %s308 = sphi 0, %s312
                  %p309 = scmp.ge.s32.totalorder %s308, 1
                  %s313 = sphi %s285, %s285
                  %s314 = sphi %s279, %s279
                $region66: #{tpu_custom_call.1} parent=62 // loop_header_branch
                  %311 = sbr.rel (%p309) target = $region70
                $region67: #{tpu_custom_call.1} parent=62 // loop_body
                  _
                $region68: #{tpu_custom_call.1} parent=62 // loop_footer
                  %s312 = sadd.s32 1, %s308
                $region69: #{tpu_custom_call.1} parent=62 // loop_footer_branch
                  %307 = sbr.rel target = $region65
                $region70: #{tpu_custom_call.1} parent=62 // loop_exit
                  _
                loop: start=0, step=1, limit=1
                $region71: #{tpu_custom_call.1} parent=62 // loop_pre_header
                  _
                $region72: #{tpu_custom_call.1} parent=62 // loop_header
                  %s317 = sphi 0, %s321
                  %p318 = scmp.ge.s32.totalorder %s317, 1
                  %s322 = sphi %s285, %s285
                  %s323 = sphi %s279, %s279
                $region73: #{tpu_custom_call.1} parent=62 // loop_header_branch
                  %320 = sbr.rel (%p318) target = $region77
                $region74: #{tpu_custom_call.1} parent=62 // loop_body
                  %v324 = vld [vmem:[%s322] sm:$0xf]
                  %325 = vst [vmem:[%s323] sm:$0xf] %v324
                  %v326 = vld [vmem:[%s322 + $0x10] sm:$0xf]
                  %327 = vst [vmem:[%s323 + $0x4] sm:$0xf] %v326
                $region75: #{tpu_custom_call.1} parent=62 // loop_footer
                  %s321 = sadd.s32 1, %s317
                $region76: #{tpu_custom_call.1} parent=62 // loop_footer_branch
                  %316 = sbr.rel target = $region72
                $region77: #{tpu_custom_call.1} parent=62 // loop_exit
                  _
              $region63: #{tpu_custom_call.1} parent=47 // pred_fallthru
                _
            $region48: #{tpu_custom_call.1} parent=43 // pred_fallthru
              _
            // Predicated region
            $region49: #{tpu_custom_call.1} parent=43 // pred_check
              _
            $region50: #{tpu_custom_call.1} parent=43 // pred_check_branch
              %291 = sbr.rel (0) target = $region52
            $region51: #{tpu_custom_call.1} parent=43 // pred_region
              loop: start=0, step=1, limit=1
              $region53: #{tpu_custom_call.1} parent=51 // loop_pre_header
                _
              $region54: #{tpu_custom_call.1} parent=51 // loop_header
                %s294 = sphi 0, %s298
                %p295 = scmp.ge.s32.totalorder %s294, 1
                %s299 = sphi %s285, %s285
                %s300 = sphi %s279, %s279
              $region55: #{tpu_custom_call.1} parent=51 // loop_header_branch
                %297 = sbr.rel (%p295) target = $region59
              $region56: #{tpu_custom_call.1} parent=51 // loop_body
                %v301 = vld [vmem:[%s299] sm:$0xf]
                %302 = vst [vmem:[%s300] sm:$0xf] %v301
                %v303 = vld [vmem:[%s299 + $0x10] sm:$0xf]
                %304 = vst [vmem:[%s300 + $0x4] sm:$0xf] %v303
              $region57: #{tpu_custom_call.1} parent=51 // loop_footer
                %s298 = sadd.s32 1, %s294
              $region58: #{tpu_custom_call.1} parent=51 // loop_footer_branch
                %293 = sbr.rel target = $region54
              $region59: #{tpu_custom_call.1} parent=51 // loop_exit
                _
            $region52: #{tpu_custom_call.1} parent=43 // pred_fallthru
              _
          $region44: #{tpu_custom_call.1} parent=39 // pred_fallthru
            _
          %328 = vnop
        $region40: #{tpu_custom_call.1} parent=35 // pred_fallthru
          _
        // Predicated region
        $region78: #{tpu_custom_call.1} parent=35 // pred_check
          %p329 = pneg %p88
        $region79: #{tpu_custom_call.1} parent=35 // pred_check_branch
          %331 = sbr.rel (%p329) target = $region81
        $region80: #{tpu_custom_call.1} parent=35 // pred_region
          %p332 = scmp.lt.s32.totalorder %s24, 1
          %s333 = scalar_select %p332, %s24, 1
          %s334 = smul.addr %s333, 4
          %s335 = smul.addr %s334, 8
          %s336 = scalar_lea.vmem %s1, %s335
        $region81: #{tpu_custom_call.1} parent=35 // pred_fallthru
          _
      $region36: #{tpu_custom_call.1} parent=5 // pred_fallthru
        _
      %p337 = scmp.le.s32.totalorder 1, %s17
      %p338 = scmp.lt.s32.totalorder %s17, 25
      %p339 = pnand %p337, %p338
      %p340 = pneg %p339
      // Predicated region
      $region82: #{tpu_custom_call.1} parent=5 // pred_check
        _
      $region83: #{tpu_custom_call.1} parent=5 // pred_check_branch
        %342 = sbr.rel (%p339) target = $region85
      $region84: #{tpu_custom_call.1} parent=5 // pred_region
        %s343 = ssub.s32 %s17, 1
        %s344 = sand.u32 %s55, 1
        %s345 = sand.u32 %s55, 1
        %s346 = smul.addr %s345, 8
        %s347 = scalar_lea.vmem [#allocation5], %s346
        // Predicated region
        $region86: #{tpu_custom_call.1} parent=84 // pred_check
          %p348 = pneg %p68
        $region87: #{tpu_custom_call.1} parent=84 // pred_check_branch
          %350 = sbr.rel (%p348) target = $region89
        $region88: #{tpu_custom_call.1} parent=84 // pred_region
          _
        $region89: #{tpu_custom_call.1} parent=84 // pred_fallthru
          _
        // Predicated region
        $region90: #{tpu_custom_call.1} parent=84 // pred_check
          %p351 = pneg %p199
        $region91: #{tpu_custom_call.1} parent=84 // pred_check_branch
          %353 = sbr.rel (%p351) target = $region93
        $region92: #{tpu_custom_call.1} parent=84 // pred_region
          %354 = dma.done [#allocation8], 16
        $region93: #{tpu_custom_call.1} parent=84 // pred_fallthru
          _
        %355 = sfence
        %s356 = sand.u32 %s55, 1
        %s357 = sand.u32 %s55, 1
        %s358 = smul.addr %s357, 8
        %s359 = scalar_lea.vmem [#allocation5], %s358
        %p360 = pneg %p68
        %p361 = pneg %p65
        %p362 = scmp.lt.s32.totalorder %s27, 1
        %s363 = scalar_select %p362, %s27, 1
        %s364 = smul.addr %s363, 4
        %s365 = smul.addr %s364, 8
        %s366 = scalar_lea.vmem %s1, %s365
        %p367 = pneg %p94
        %p368 = pneg %p91
        %p369 = pneg %p115
        %p370 = pneg %p112
        %p371 = pneg %p136
        %p372 = pneg %p133
        %p373 = pneg %p157
        %p374 = pneg %p154
        %p375 = pneg %p178
        %p376 = pneg %p175
        %p377 = pneg %p199
        %p378 = pneg %p196
        %p379 = pneg %p231
        %p380 = pneg %p228
        %s381 = sand.u32 %s218, 1
        %s382 = scalar_lea.sflag [#allocation7], %s381
        %s383 = sand.u32 %s218, 1
        %s384 = smul.addr %s383, 8
        %s385 = scalar_lea.vmem [#allocation9], %s384
        %p386 = scmp.eq.s32.totalorder %s28, 1
        %s387 = scalar_select %p386, 3, %s29
        %p388 = scmp.lt.s32.totalorder %s27, 1
        %s389 = scalar_select %p388, %s27, 1
        %s390 = smul.addr %s389, 4
        %s391 = smul.addr %s390, 8
        %s392 = scalar_lea.vmem %s1, %s391
        %p393 = scmp.eq.s32.totalorder %s28, 2
        %s394 = scalar_select %p393, %s29, 0
        %s396 = sld [smem:[#allocation6]]
        %s397 = sld [smem:[#allocation6 + $0x1]]
        %v398 = vld [vmem:[%s5] sm:$0xff]
        %v399 = vld [vmem:[%s5 + $0x8] sm:$0xff]
        %v400 = vld [vmem:[%s5 + $0x10] sm:$0xff]
        %v401 = vld [vmem:[%s5 + $0x18] sm:$0xff]
        %p402 = scmp.eq.s32.totalorder %s28, 0
        %p403 = scmp.eq.s32.totalorder %s29, 0
        %p404 = pnand %p402, %p403
        %p405 = pneg %p404
        // Predicated region
        $region94: #{tpu_custom_call.1} parent=84 // pred_check
          _
        $region95: #{tpu_custom_call.1} parent=84 // pred_check_branch
          %407 = sbr.rel (%p404) target = $region97
        $region96: #{tpu_custom_call.1} parent=84 // pred_region
          %vm408 = vcmask 3072
          %409 = vst.msk [vmem:[#allocation4] sm:$0xf] %vm408, 0.0
          %410 = vst [vmem:[#allocation2] sm:$0xff] 0
          %411 = vst [vmem:[#allocation2 + $0x30] sm:$0xff] 0
          %412 = vst [vmem:[#allocation2 + $0x28] sm:$0xff] 0
          %413 = vst [vmem:[#allocation2 + $0x58] sm:$0xff] 0
        $region97: #{tpu_custom_call.1} parent=84 // pred_fallthru
          _
        // Predicated region
        $region98: #{tpu_custom_call.1} parent=84 // pred_check
          %p414 = pneg %p402
        $region99: #{tpu_custom_call.1} parent=84 // pred_check_branch
          %416 = sbr.rel (%p414) target = $region101
        $region100: #{tpu_custom_call.1} parent=84 // pred_region
          %v417 = vld [vmem:[%s2] sm:$0xf]
          %v418 = vld [vmem:[%s2 + $0x4] sm:$0xf]
          %v419 = vld [vmem:[%s2 + $0x8] sm:$0xf]
          %v420 = vld [vmem:[%s2 + $0xc] sm:$0xf]
          %v421 = vld [vmem:[%s347] sm:$0xf]
          %v422 = vld [vmem:[%s347 + $0x4] sm:$0xf]
          %v423 = vld [vmem:[%s392] sm:$0xff]
          %v424 = vld [vmem:[%s392 + $0x8] sm:$0xff]
          %v425 = vld [vmem:[%s392 + $0x10] sm:$0xff]
          %v426 = vld [vmem:[%s392 + $0x18] sm:$0xff]
          %428 = vset.pattern.permute.xlu0 0
          %429 = vperm.xlu0 %428, %v423
          %v430 = vpop.permute.xlu0 %429
          %433 = vset.pattern.permute.xlu0 0
          %434 = vperm.xlu0 %433, %v424
          %v435 = vpop.permute.xlu0 %434
          %438 = vset.pattern.permute.xlu0 0
          %439 = vperm.xlu0 %438, %v425
          %v440 = vpop.permute.xlu0 %439
          %443 = vset.pattern.permute.xlu0 0
          %444 = vperm.xlu0 %443, %v426
          %v445 = vpop.permute.xlu0 %444
          %v451 = vunpack.c.l.b16 %v417
          %v452 = vunpack.c.l.b16 %v418
          %v453 = vunpack.c.l.b16 %v419
          %v454 = vunpack.c.l.b16 %v420
          %v455 = vpack.c.b16 %v452, %v451
          %v456 = vpack.c.b16 %v454, %v453
          %v459 = vunpack.c.l.b16 %v421
          %v460 = vunpack.c.l.b16 %v422
          %v461 = vpack.c.b16 %v460, %v459
          %vm463 = vcmask 130048
          %v465 = vsel %vm463, %v455, 0
          %v468 = vsel %vm463, %v456, 0
          %470 = vmatprep.subr.bf16.mxu0 0
          %471 = vmatpush1.bf16.msra.mxu0 %v461
          %472 = vmatprep.subr.bf16.mxu0 0
          %473 = vmatpush1.bf16.msra.mxu0 0
          %474 = vmatprep.subr.bf16.mxu0 0
          %475 = vmatpush1.bf16.msra.mxu0 0
          %476 = vmatprep.subr.bf16.mxu0 0
          %477 = vmatpush1.bf16.msra.mxu0 0
          %478 = vmatprep.subr.bf16.mxu0 0
          %479 = vmatpush1.bf16.msra.mxu0 0
          %480 = vmatprep.subr.bf16.mxu0 0
          %481 = vmatpush1.bf16.msra.mxu0 0
          %482 = vmatprep.subr.bf16.mxu0 0
          %483 = vmatpush1.bf16.msra.mxu0 0
          %484 = vmatprep.subr.bf16.mxu0 0
          %485 = vmatpush1.bf16.msra.mxu0 0
          %486 = vmatprep.subr.bf16.mxu0 0
          %487 = vmatpush1.bf16.msra.mxu0 0
          %488 = vmatprep.subr.bf16.mxu0 0
          %489 = vmatpush1.bf16.msra.mxu0 0
          %490 = vmatprep.subr.bf16.mxu0 0
          %491 = vmatpush1.bf16.msra.mxu0 0
          %492 = vmatprep.subr.bf16.mxu0 0
          %493 = vmatpush1.bf16.msra.mxu0 0
          %494 = vmatprep.subr.bf16.mxu0 0
          %495 = vmatpush1.bf16.msra.mxu0 0
          %496 = vmatprep.subr.bf16.mxu0 0
          %497 = vmatpush1.bf16.msra.mxu0 0
          %498 = vmatprep.subr.bf16.mxu0 0
          %499 = vmatpush1.bf16.msra.mxu0 0
          %500 = vmatprep.subr.bf16.mxu0 0
          %501 = vmatpush1.bf16.msra.mxu0 0
          %502 = vmatprep.mubr.bf16.mxu0 0
          %503 = vmatmul.mubr.bf16.gmra.mrb[0].mxu0 %v465
          %v504 = vpop.f32.mrb[0].mxu0
          %v505 = vadd.f32 %v430, %v504
          %v506 = vpop.f32.mrb[0].mxu0
          %v507 = vpop.f32.mrb[0].mxu0
          %v508 = vadd.f32 %v435, %v507
          %v509 = vpop.f32.mrb[0].mxu0
          %510 = vmatprep.mubr.bf16.mxu0 0
          %511 = vmatmul.mubr.bf16.gmra.mrb[0].mxu0 %v468
          %v512 = vpop.f32.mrb[0].mxu0
          %v513 = vadd.f32 %v440, %v512
          %v514 = vpop.f32.mrb[0].mxu0
          %v515 = vpop.f32.mrb[0].mxu0
          %v516 = vadd.f32 %v445, %v515
          %v517 = vpop.f32.mrb[0].mxu0
          %518 = vdwg.mxu0
          %vm519 = vcmp.gt.f32.partialorder %v505, 0.0
          %vm520 = vcmp.gt.f32.partialorder %v508, 0.0
          %vm521 = vcmp.gt.f32.partialorder %v513, 0.0
          %vm522 = vcmp.gt.f32.partialorder %v516, 0.0
          %v523 = vstv %s396
          %v524 = vmul.f32 %v505, %v523
          %v525 = vmul.f32 %v508, %v523
          %v526 = vmul.f32 %v513, %v523
          %v527 = vmul.f32 %v516, %v523
          %v528 = vsel %vm519, %v505, %v524
          %v529 = vsel %vm520, %v508, %v525
          %v530 = vsel %vm521, %v513, %v526
          %v531 = vsel %vm522, %v516, %v527
          %v532 = vld [vmem:[#allocation4] sm:$0x1]
          %v533 = vadd.f32 %v528, %v529
          %v534 = vadd.f32 %v533, %v530
          %v535 = vadd.f32 %v534, %v531
          %536 = vadd.xlane.f32.xlu0 %v535
          %v537 = vpop.xlane.xlu0 %536
          %v538 = vrot.slane %v537, 4
          %v539 = vadd.f32 %v537, %v538
          %v540 = vrot.slane %v539, 2
          %v541 = vadd.f32 %v539, %v540
          %v542 = vrot.slane %v541, 1
          %v543 = vadd.f32 %v541, %v542
          %s544 = vtos %v543
          %v545 = vstv %s544
          %v546 = vadd.f32 %v532, %v545
          %vm547 = vcmask 0
          %548 = vst.msk [vmem:[#allocation4] sm:$0x1] %vm547, %v546
          %v549 = vld [vmem:[#allocation4 + $0x1] sm:$0x1]
          %v550 = vmul.f32 %v528, %v528
          %v551 = vmul.f32 %v529, %v529
          %v552 = vmul.f32 %v530, %v530
          %v553 = vmul.f32 %v531, %v531
          %v554 = vadd.f32 %v550, %v551
          %v555 = vadd.f32 %v554, %v552
          %v556 = vadd.f32 %v555, %v553
          %557 = vadd.xlane.f32.xlu0 %v556
          %v558 = vpop.xlane.xlu0 %557
          %v559 = vrot.slane %v558, 4
          %v560 = vadd.f32 %v558, %v559
          %v561 = vrot.slane %v560, 2
          %v562 = vadd.f32 %v560, %v561
          %v563 = vrot.slane %v562, 1
          %v564 = vadd.f32 %v562, %v563
          %s565 = vtos %v564
          %v566 = vstv %s565
          %v567 = vadd.f32 %v549, %v566
          %568 = vst.msk [vmem:[#allocation4 + $0x1] sm:$0x1] %vm547, %v567
          %s569 = smul.u32 %s29, 128
          %s570 = sadd.s32 %s569, 128
          %v571 = vpack.c.bf16 %v529, %v528
          %v572 = vpack.c.bf16 %v531, %v530
          %s573 = sshra.s32 %s570, 7
          %s574 = sand.u32 %s570, 127
          %s575 = smul.addr %s573, 8
          %s576 = scalar_lea.vmem [#allocation2], %s575
          %577 = vst [vmem:[%s576] sm:$0xff] %v571
          %578 = vst [vmem:[%s576 + $0x30] sm:$0xff] %v572
        $region101: #{tpu_custom_call.1} parent=84 // pred_fallthru
          _
        %p579 = scmp.eq.s32.totalorder %s28, 1
        // Predicated region
        $region102: #{tpu_custom_call.1} parent=84 // pred_check
          %p580 = pneg %p579
        $region103: #{tpu_custom_call.1} parent=84 // pred_check_branch
          %582 = sbr.rel (%p580) target = $region105
        $region104: #{tpu_custom_call.1} parent=84 // pred_region
          %v583 = vld [vmem:[#allocation4] sm:$0x1]
          %v584 = vld [vmem:[#allocation4 + $0x1] sm:$0x1]
          %v585 = vmul.f32 %v583, 6.1035156e-05
          %v586 = vmul.f32 %v583, %v585
          %v587 = vsub.f32 %v584, %v586
          %v588 = vmul.f32 %v587, 6.103888e-05
          %v589 = vadd.f32 %v588, 1e-05
          %v590 = vrsqrt.pop %v589
          %v591 = vlaneseq
          %v592 = vshrl.u32 %v591, 7
          %v593 = vsub.s32 0, %v592
          %v594 = vrot.slane %v590, %v593
          %v595 = vmul.f32 %v398, %v594
          %v596 = vmul.f32 %v399, %v594
          %v597 = vmul.f32 %v400, %v594
          %v598 = vmul.f32 %v401, %v594
          %v599 = vlaneseq
          %v600 = vshrl.u32 %v599, 7
          %v601 = vsub.s32 0, %v600
          %v602 = vrot.slane %v585, %v601
          %v603 = vmul.f32 %v602, %v595
          %v604 = vmul.f32 %v602, %v596
          %v605 = vmul.f32 %v602, %v597
          %v606 = vmul.f32 %v602, %v598
          %611 = vrot.lane.b32.xlu0 %v603, 1
          %v612 = vpop.permute.xlu0 %611
          %613 = vrot.lane.b32.xlu0 %v604, 1
          %v614 = vpop.permute.xlu0 %613
          %615 = vrot.lane.b32.xlu0 %v605, 1
          %v616 = vpop.permute.xlu0 %615
          %617 = vrot.lane.b32.xlu0 %v606, 1
          %v618 = vpop.permute.xlu0 %617
          %v623 = vsub.f32 %v398, %v612
          %v624 = vsub.f32 %v399, %v614
          %v625 = vsub.f32 %v400, %v616
          %v626 = vsub.f32 %v401, %v618
          %s627 = smul.u32 %s29, 128
          %s628 = sshra.s32 %s627, 7
          %s629 = sand.u32 %s627, 127
          %s630 = smul.addr %s628, 8
          %s631 = scalar_lea.vmem [#allocation2], %s630
          %v632 = vld [vmem:[%s631] sm:$0xff]
          %v633 = vld [vmem:[%s631 + $0x8] sm:$0xff]
          %v634 = vld [vmem:[%s631 + $0x10] sm:$0xff]
          %v635 = vld [vmem:[%s631 + $0x30] sm:$0xff]
          %v636 = vld [vmem:[%s631 + $0x38] sm:$0xff]
          %v637 = vld [vmem:[%s631 + $0x40] sm:$0xff]
          %v638 = vunpack.c.l.bf16 %v632
          %v639 = vunpack.c.l.bf16 %v633
          %v640 = vunpack.c.l.bf16 %v634
          %v641 = vunpack.c.h.bf16 %v632
          %v642 = vunpack.c.h.bf16 %v633
          %v643 = vunpack.c.h.bf16 %v634
          %v644 = vunpack.c.l.bf16 %v635
          %v645 = vunpack.c.l.bf16 %v636
          %v646 = vunpack.c.l.bf16 %v637
          %v647 = vunpack.c.h.bf16 %v635
          %v648 = vunpack.c.h.bf16 %v636
          %v649 = vunpack.c.h.bf16 %v637
          %v650 = vlaneseq
          %v651 = vand.u32 %v650, 127
          %v652 = vadd.s32 %v651, 128
          %v653 = vadd.s32 %v651, 256
          %s654 = ssub.s32 %s627, 128
          %v655 = vstv %s654
          %v656 = vadd.s32 %v651, %v655
          %v657 = vadd.s32 %v652, %v655
          %v658 = vadd.s32 %v653, %v655
          %vm659 = vcmp.ge.s32.totalorder %v656, 0
          %vm660 = vcmp.ge.s32.totalorder %v657, 0
          %vm661 = vcmp.ge.s32.totalorder %v658, 0
          %vm662 = vcmp.lt.s32.totalorder %v656, 512
          %vm663 = vcmp.lt.s32.totalorder %v657, 512
          %vm664 = vcmp.lt.s32.totalorder %v658, 512
          %vm665 = vmand %vm659, %vm662
          %vm666 = vmand %vm660, %vm663
          %vm667 = vmand %vm661, %vm664
          %669 = vset.pattern.permute.xlu0 0
          %670 = vperm.xlu0 %669, %v595
          %v671 = vpop.permute.xlu0 %670
          %674 = vset.pattern.permute.xlu0 0
          %675 = vperm.xlu0 %674, %v596
          %v676 = vpop.permute.xlu0 %675
          %679 = vset.pattern.permute.xlu0 0
          %680 = vperm.xlu0 %679, %v597
          %v681 = vpop.permute.xlu0 %680
          %684 = vset.pattern.permute.xlu0 0
          %685 = vperm.xlu0 %684, %v598
          %v686 = vpop.permute.xlu0 %685
          %v688 = vmul.f32 %v638, %v671
          %v689 = vmul.f32 %v639, %v671
          %v690 = vmul.f32 %v640, %v671
          %v691 = vmul.f32 %v641, %v676
          %v692 = vmul.f32 %v642, %v676
          %v693 = vmul.f32 %v643, %v676
          %v694 = vmul.f32 %v644, %v681
          %v695 = vmul.f32 %v645, %v681
          %v696 = vmul.f32 %v646, %v681
          %v697 = vmul.f32 %v647, %v686
          %v698 = vmul.f32 %v648, %v686
          %v699 = vmul.f32 %v649, %v686
          %701 = vset.pattern.permute.xlu0 1
          %702 = vperm.xlu0 %701, %v623
          %v703 = vpop.permute.xlu0 %702
          %706 = vset.pattern.permute.xlu0 1
          %707 = vperm.xlu0 %706, %v624
          %v708 = vpop.permute.xlu0 %707
          %711 = vset.pattern.permute.xlu0 1
          %712 = vperm.xlu0 %711, %v625
          %v713 = vpop.permute.xlu0 %712
          %716 = vset.pattern.permute.xlu0 1
          %717 = vperm.xlu0 %716, %v626
          %v718 = vpop.permute.xlu0 %717
          %v720 = vadd.f32 %v688, %v703
          %v721 = vadd.f32 %v689, %v703
          %v722 = vadd.f32 %v690, %v703
          %v723 = vadd.f32 %v691, %v708
          %v724 = vadd.f32 %v692, %v708
          %v725 = vadd.f32 %v693, %v708
          %v726 = vadd.f32 %v694, %v713
          %v727 = vadd.f32 %v695, %v713
          %v728 = vadd.f32 %v696, %v713
          %v729 = vadd.f32 %v697, %v718
          %v730 = vadd.f32 %v698, %v718
          %v731 = vadd.f32 %v699, %v718
          %v732 = vsel %vm665, 1, 0
          %v733 = vsel %vm666, 1, 0
          %v734 = vsel %vm667, 1, 0
          %vm735 = vcmp.eq.s32.totalorder %v732, 1
          %vm736 = vcmp.eq.s32.totalorder %v733, 1
          %vm737 = vcmp.eq.s32.totalorder %v734, 1
          %v738 = vsel %vm735, %v720, 0.0
          %v739 = vsel %vm736, %v721, 0.0
          %v740 = vsel %vm737, %v722, 0.0
          %v741 = vsel %vm735, %v723, 0.0
          %v742 = vsel %vm736, %v724, 0.0
          %v743 = vsel %vm737, %v725, 0.0
          %v744 = vsel %vm735, %v726, 0.0
          %v745 = vsel %vm736, %v727, 0.0
          %v746 = vsel %vm737, %v728, 0.0
          %v747 = vsel %vm735, %v729, 0.0
          %v748 = vsel %vm736, %v730, 0.0
          %v749 = vsel %vm737, %v731, 0.0
          %751 = vset.pattern.permute.xlu0 5
          %752 = vperm.xlu0 %751, %v398
          %v753 = vpop.permute.xlu0 %752
          %756 = vset.pattern.permute.xlu0 5
          %757 = vperm.xlu0 %756, %v399
          %v758 = vpop.permute.xlu0 %757
          %761 = vset.pattern.permute.xlu0 5
          %762 = vperm.xlu0 %761, %v400
          %v763 = vpop.permute.xlu0 %762
          %766 = vset.pattern.permute.xlu0 5
          %767 = vperm.xlu0 %766, %v401
          %v768 = vpop.permute.xlu0 %767
          %v770 = vmul.f32 %v753, %v738
          %v771 = vmul.f32 %v753, %v739
          %v772 = vmul.f32 %v758, %v741
          %v773 = vmul.f32 %v758, %v742
          %v774 = vmul.f32 %v763, %v744
          %v775 = vmul.f32 %v763, %v745
          %v776 = vmul.f32 %v768, %v747
          %v777 = vmul.f32 %v768, %v748
          %778 = vset.pattern.permute.xlu0 6
          %779 = vperm.xlu0 %778, %v398
          %v780 = vpop.permute.xlu0 %779
          %782 = vset.pattern.permute.xlu0 6
          %783 = vperm.xlu0 %782, %v399
          %v784 = vpop.permute.xlu0 %783
          %786 = vset.pattern.permute.xlu0 6
          %787 = vperm.xlu0 %786, %v400
          %v788 = vpop.permute.xlu0 %787
          %790 = vset.pattern.permute.xlu0 6
          %791 = vperm.xlu0 %790, %v401
          %v792 = vpop.permute.xlu0 %791
          %v794 = vmul.f32 %v780, %v739
          %v795 = vmul.f32 %v784, %v742
          %v796 = vmul.f32 %v788, %v745
          %v797 = vmul.f32 %v792, %v748
          %802 = vrot.lane.b32.xlu0 %v794, 126
          %v803 = vpop.permute.xlu0 %802
          %804 = vrot.lane.b32.xlu0 %v795, 126
          %v805 = vpop.permute.xlu0 %804
          %806 = vrot.lane.b32.xlu0 %v796, 126
          %v807 = vpop.permute.xlu0 %806
          %808 = vrot.lane.b32.xlu0 %v797, 126
          %v809 = vpop.permute.xlu0 %808
          %v814 = vadd.f32 %v770, %v803
          %v815 = vadd.f32 %v771, %v803
          %v816 = vadd.f32 %v772, %v805
          %v817 = vadd.f32 %v773, %v805
          %v818 = vadd.f32 %v774, %v807
          %v819 = vadd.f32 %v775, %v807
          %v820 = vadd.f32 %v776, %v809
          %v821 = vadd.f32 %v777, %v809
          %822 = vset.pattern.permute.xlu0 7
          %823 = vperm.xlu0 %822, %v398
          %v824 = vpop.permute.xlu0 %823
          %826 = vset.pattern.permute.xlu0 7
          %827 = vperm.xlu0 %826, %v399
          %v828 = vpop.permute.xlu0 %827
          %830 = vset.pattern.permute.xlu0 7
          %831 = vperm.xlu0 %830, %v400
          %v832 = vpop.permute.xlu0 %831
          %834 = vset.pattern.permute.xlu0 7
          %835 = vperm.xlu0 %834, %v401
          %v836 = vpop.permute.xlu0 %835
          %v838 = vmul.f32 %v824, %v739
          %v839 = vmul.f32 %v824, %v740
          %v840 = vmul.f32 %v828, %v742
          %v841 = vmul.f32 %v828, %v743
          %v842 = vmul.f32 %v832, %v745
          %v843 = vmul.f32 %v832, %v746
          %v844 = vmul.f32 %v836, %v748
          %v845 = vmul.f32 %v836, %v749
          %854 = vrot.lane.b32.xlu0 %v838, 124
          %v855 = vpop.permute.xlu0 %854
          %856 = vrot.lane.b32.xlu0 %v839, 124
          %v857 = vpop.permute.xlu0 %856
          %858 = vrot.lane.b32.xlu0 %v840, 124
          %v859 = vpop.permute.xlu0 %858
          %860 = vrot.lane.b32.xlu0 %v841, 124
          %v861 = vpop.permute.xlu0 %860
          %862 = vrot.lane.b32.xlu0 %v842, 124
          %v863 = vpop.permute.xlu0 %862
          %864 = vrot.lane.b32.xlu0 %v843, 124
          %v865 = vpop.permute.xlu0 %864
          %866 = vrot.lane.b32.xlu0 %v844, 124
          %v867 = vpop.permute.xlu0 %866
          %868 = vrot.lane.b32.xlu0 %v845, 124
          %v869 = vpop.permute.xlu0 %868
          %vm870 = vcmask 1014784
          %v871 = vsel %vm870, %v855, %v857
          %v872 = vsel %vm870, %v859, %v861
          %v873 = vsel %vm870, %v863, %v865
          %v874 = vsel %vm870, %v867, %v869
          %v883 = vadd.f32 %v814, %v855
          %v884 = vadd.f32 %v815, %v871
          %v885 = vadd.f32 %v816, %v859
          %v886 = vadd.f32 %v817, %v872
          %v887 = vadd.f32 %v818, %v863
          %v888 = vadd.f32 %v819, %v873
          %v889 = vadd.f32 %v820, %v867
          %v890 = vadd.f32 %v821, %v874
          %891 = vset.pattern.permute.xlu0 4
          %892 = vperm.xlu0 %891, %v398
          %v893 = vpop.permute.xlu0 %892
          %895 = vset.pattern.permute.xlu0 4
          %896 = vperm.xlu0 %895, %v399
          %v897 = vpop.permute.xlu0 %896
          %899 = vset.pattern.permute.xlu0 4
          %900 = vperm.xlu0 %899, %v400
          %v901 = vpop.permute.xlu0 %900
          %903 = vset.pattern.permute.xlu0 4
          %904 = vperm.xlu0 %903, %v401
          %v905 = vpop.permute.xlu0 %904
          %v907 = vadd.f32 %v883, %v893
          %v908 = vadd.f32 %v884, %v893
          %v909 = vadd.f32 %v885, %v897
          %v910 = vadd.f32 %v886, %v897
          %v911 = vadd.f32 %v887, %v901
          %v912 = vadd.f32 %v888, %v901
          %v913 = vadd.f32 %v889, %v905
          %v914 = vadd.f32 %v890, %v905
          %vm915 = vcmp.gt.f32.partialorder %v907, 0.0
          %vm916 = vcmp.gt.f32.partialorder %v908, 0.0
          %vm917 = vcmp.gt.f32.partialorder %v909, 0.0
          %vm918 = vcmp.gt.f32.partialorder %v910, 0.0
          %vm919 = vcmp.gt.f32.partialorder %v911, 0.0
          %vm920 = vcmp.gt.f32.partialorder %v912, 0.0
          %vm921 = vcmp.gt.f32.partialorder %v913, 0.0
          %vm922 = vcmp.gt.f32.partialorder %v914, 0.0
          %v923 = vstv %s397
          %v924 = vmul.f32 %v907, %v923
          %v925 = vmul.f32 %v908, %v923
          %v926 = vmul.f32 %v909, %v923
          %v927 = vmul.f32 %v910, %v923
          %v928 = vmul.f32 %v911, %v923
          %v929 = vmul.f32 %v912, %v923
          %v930 = vmul.f32 %v913, %v923
          %v931 = vmul.f32 %v914, %v923
          %v932 = vsel %vm915, %v907, %v924
          %v933 = vsel %vm916, %v908, %v925
          %v934 = vsel %vm917, %v909, %v926
          %v935 = vsel %vm918, %v910, %v927
          %v936 = vsel %vm919, %v911, %v928
          %v937 = vsel %vm920, %v912, %v929
          %v938 = vsel %vm921, %v913, %v930
          %v939 = vsel %vm922, %v914, %v931
          %v940 = vld [vmem:[#allocation4 + $0x2] sm:$0x1]
          %949 = vrot.lane.b32.xlu0 %v932, 2
          %v950 = vpop.permute.xlu0 %949
          %951 = vrot.lane.b32.xlu0 %v933, 2
          %v952 = vpop.permute.xlu0 %951
          %953 = vrot.lane.b32.xlu0 %v934, 2
          %v954 = vpop.permute.xlu0 %953
          %955 = vrot.lane.b32.xlu0 %v935, 2
          %v956 = vpop.permute.xlu0 %955
          %957 = vrot.lane.b32.xlu0 %v936, 2
          %v958 = vpop.permute.xlu0 %957
          %959 = vrot.lane.b32.xlu0 %v937, 2
          %v960 = vpop.permute.xlu0 %959
          %961 = vrot.lane.b32.xlu0 %v938, 2
          %v962 = vpop.permute.xlu0 %961
          %963 = vrot.lane.b32.xlu0 %v939, 2
          %v964 = vpop.permute.xlu0 %963
          %vm965 = vcmask 15360
          %v966 = vsel %vm965, %v950, %v952
          %v967 = vsel %vm965, %v954, %v956
          %v968 = vsel %vm965, %v958, %v960
          %v969 = vsel %vm965, %v962, %v964
          %v974 = vadd.f32 %v966, %v967
          %v975 = vadd.f32 %v974, %v968
          %v976 = vadd.f32 %v975, %v969
          %977 = vadd.xlane.f32.xlu0 %v976
          %v978 = vpop.xlane.xlu0 %977
          %v979 = vrot.slane %v978, 4
          %v980 = vadd.f32 %v978, %v979
          %v981 = vrot.slane %v980, 2
          %v982 = vadd.f32 %v980, %v981
          %v983 = vrot.slane %v982, 1
          %v984 = vadd.f32 %v982, %v983
          %s985 = vtos %v984
          %v986 = vstv %s985
          %v987 = vadd.f32 %v940, %v986
          %vm988 = vcmask 0
          %989 = vst.msk [vmem:[#allocation4 + $0x2] sm:$0x1] %vm988, %v987
          %v990 = vld [vmem:[#allocation4 + $0x3] sm:$0x1]
          %v991 = vmul.f32 %v932, %v932
          %v992 = vmul.f32 %v933, %v933
          %v993 = vmul.f32 %v934, %v934
          %v994 = vmul.f32 %v935, %v935
          %v995 = vmul.f32 %v936, %v936
          %v996 = vmul.f32 %v937, %v937
          %v997 = vmul.f32 %v938, %v938
          %v998 = vmul.f32 %v939, %v939
          %1007 = vrot.lane.b32.xlu0 %v991, 2
          %v1008 = vpop.permute.xlu0 %1007
          %1009 = vrot.lane.b32.xlu0 %v992, 2
          %v1010 = vpop.permute.xlu0 %1009
          %1011 = vrot.lane.b32.xlu0 %v993, 2
          %v1012 = vpop.permute.xlu0 %1011
          %1013 = vrot.lane.b32.xlu0 %v994, 2
          %v1014 = vpop.permute.xlu0 %1013
          %1015 = vrot.lane.b32.xlu0 %v995, 2
          %v1016 = vpop.permute.xlu0 %1015
          %1017 = vrot.lane.b32.xlu0 %v996, 2
          %v1018 = vpop.permute.xlu0 %1017
          %1019 = vrot.lane.b32.xlu0 %v997, 2
          %v1020 = vpop.permute.xlu0 %1019
          %1021 = vrot.lane.b32.xlu0 %v998, 2
          %v1022 = vpop.permute.xlu0 %1021
          %v1023 = vsel %vm965, %v1008, %v1010
          %v1024 = vsel %vm965, %v1012, %v1014
          %v1025 = vsel %vm965, %v1016, %v1018
          %v1026 = vsel %vm965, %v1020, %v1022
          %v1031 = vadd.f32 %v1023, %v1024
          %v1032 = vadd.f32 %v1031, %v1025
          %v1033 = vadd.f32 %v1032, %v1026
          %1034 = vadd.xlane.f32.xlu0 %v1033
          %v1035 = vpop.xlane.xlu0 %1034
          %v1036 = vrot.slane %v1035, 4
          %v1037 = vadd.f32 %v1035, %v1036
          %v1038 = vrot.slane %v1037, 2
          %v1039 = vadd.f32 %v1037, %v1038
          %v1040 = vrot.slane %v1039, 1
          %v1041 = vadd.f32 %v1039, %v1040
          %s1042 = vtos %v1041
          %v1043 = vstv %s1042
          %v1044 = vadd.f32 %v990, %v1043
          %1045 = vst.msk [vmem:[#allocation4 + $0x3] sm:$0x1] %vm988, %v1044
          %v1046 = vpack.c.bf16 %v934, %v932
          %v1047 = vpack.c.bf16 %v935, %v933
          %v1048 = vpack.c.bf16 %v938, %v936
          %v1049 = vpack.c.bf16 %v939, %v937
          %1054 = vrot.lane.b32.xlu0 %v1046, 2
          %v1055 = vpop.permute.xlu0 %1054
          %1056 = vrot.lane.b32.xlu0 %v1047, 2
          %v1057 = vpop.permute.xlu0 %1056
          %1058 = vrot.lane.b32.xlu0 %v1048, 2
          %v1059 = vpop.permute.xlu0 %1058
          %1060 = vrot.lane.b32.xlu0 %v1049, 2
          %v1061 = vpop.permute.xlu0 %1060
          %vm1062 = vcmask 15360
          %v1063 = vsel %vm1062, %v1055, %v1057
          %v1064 = vsel %vm1062, %v1059, %v1061
          %s1067 = smul.addr %s628, 8
          %s1068 = scalar_lea.vmem [#allocation3], %s1067
          %1069 = vst [vmem:[%s1068] sm:$0xff] %v1063
          %1070 = vst [vmem:[%s1068 + $0x20] sm:$0xff] %v1064
        $region105: #{tpu_custom_call.1} parent=84 // pred_fallthru
          _
        %p1071 = scmp.eq.s32.totalorder %s28, 2
        // Predicated region
        $region106: #{tpu_custom_call.1} parent=84 // pred_check
          %p1072 = pneg %p1071
        $region107: #{tpu_custom_call.1} parent=84 // pred_check_branch
          %1074 = sbr.rel (%p1072) target = $region109
        $region108: #{tpu_custom_call.1} parent=84 // pred_region
          %v1075 = vld [vmem:[#allocation4 + $0x2] sm:$0x1]
          %v1076 = vld [vmem:[#allocation4 + $0x3] sm:$0x1]
          %v1077 = vmul.f32 %v1075, 6.1035156e-05
          %v1078 = vmul.f32 %v1075, %v1077
          %v1079 = vsub.f32 %v1076, %v1078
          %v1080 = vmul.f32 %v1079, 6.103888e-05
          %v1081 = vadd.f32 %v1080, 1e-05
          %v1082 = vrsqrt.pop %v1081
          %v1083 = vlaneseq
          %v1084 = vshrl.u32 %v1083, 7
          %v1085 = vsub.s32 0, %v1084
          %v1086 = vrot.slane %v1082, %v1085
          %1088 = vrot.lane.b32.xlu0 %v1086, 2
          %v1089 = vpop.permute.xlu0 %1088
          %v1091 = vmul.f32 %v398, %v1089
          %v1092 = vmul.f32 %v399, %v1089
          %v1093 = vmul.f32 %v400, %v1089
          %v1094 = vmul.f32 %v401, %v1089
          %v1095 = vlaneseq
          %v1096 = vshrl.u32 %v1095, 7
          %v1097 = vsub.s32 0, %v1096
          %v1098 = vrot.slane %v1077, %v1097
          %1103 = vrot.lane.b32.xlu0 %v1091, 126
          %v1104 = vpop.permute.xlu0 %1103
          %1105 = vrot.lane.b32.xlu0 %v1092, 126
          %v1106 = vpop.permute.xlu0 %1105
          %1107 = vrot.lane.b32.xlu0 %v1093, 126
          %v1108 = vpop.permute.xlu0 %1107
          %1109 = vrot.lane.b32.xlu0 %v1094, 126
          %v1110 = vpop.permute.xlu0 %1109
          %v1115 = vmul.f32 %v1098, %v1104
          %v1116 = vmul.f32 %v1098, %v1106
          %v1117 = vmul.f32 %v1098, %v1108
          %v1118 = vmul.f32 %v1098, %v1110
          %1123 = vrot.lane.b32.xlu0 %v1115, 3
          %v1124 = vpop.permute.xlu0 %1123
          %1125 = vrot.lane.b32.xlu0 %v1116, 3
          %v1126 = vpop.permute.xlu0 %1125
          %1127 = vrot.lane.b32.xlu0 %v1117, 3
          %v1128 = vpop.permute.xlu0 %1127
          %1129 = vrot.lane.b32.xlu0 %v1118, 3
          %v1130 = vpop.permute.xlu0 %1129
          %v1135 = vsub.f32 %v398, %v1124
          %v1136 = vsub.f32 %v399, %v1126
          %v1137 = vsub.f32 %v400, %v1128
          %v1138 = vsub.f32 %v401, %v1130
          %s1139 = smul.u32 %s29, 128
          %s1140 = sshra.s32 %s1139, 7
          %s1141 = sand.u32 %s1139, 127
          %s1142 = smul.addr %s1140, 8
          %s1143 = scalar_lea.vmem [#allocation3], %s1142
          %v1144 = vld [vmem:[%s1143] sm:$0xff]
          %v1145 = vld [vmem:[%s1143 + $0x20] sm:$0xff]
          %v1146 = vunpack.c.l.bf16 %v1144
          %v1147 = vunpack.c.h.bf16 %v1144
          %v1148 = vunpack.c.l.bf16 %v1145
          %v1149 = vunpack.c.h.bf16 %v1145
          %1150 = vset.pattern.permute.xlu0 2
          %1151 = vperm.xlu0 %1150, %v1091
          %v1152 = vpop.permute.xlu0 %1151
          %1154 = vset.pattern.permute.xlu0 2
          %1155 = vperm.xlu0 %1154, %v1092
          %v1156 = vpop.permute.xlu0 %1155
          %1158 = vset.pattern.permute.xlu0 2
          %1159 = vperm.xlu0 %1158, %v1093
          %v1160 = vpop.permute.xlu0 %1159
          %1162 = vset.pattern.permute.xlu0 2
          %1163 = vperm.xlu0 %1162, %v1094
          %v1164 = vpop.permute.xlu0 %1163
          %v1166 = vmul.f32 %v1146, %v1152
          %v1167 = vmul.f32 %v1147, %v1156
          %v1168 = vmul.f32 %v1148, %v1160
          %v1169 = vmul.f32 %v1149, %v1164
          %1171 = vset.pattern.permute.xlu0 3
          %1172 = vperm.xlu0 %1171, %v1135
          %v1173 = vpop.permute.xlu0 %1172
          %1176 = vset.pattern.permute.xlu0 3
          %1177 = vperm.xlu0 %1176, %v1136
          %v1178 = vpop.permute.xlu0 %1177
          %1181 = vset.pattern.permute.xlu0 3
          %1182 = vperm.xlu0 %1181, %v1137
          %v1183 = vpop.permute.xlu0 %1182
          %1186 = vset.pattern.permute.xlu0 3
          %1187 = vperm.xlu0 %1186, %v1138
          %v1188 = vpop.permute.xlu0 %1187
          %v1190 = vadd.f32 %v1166, %v1173
          %v1191 = vadd.f32 %v1167, %v1178
          %v1192 = vadd.f32 %v1168, %v1183
          %v1193 = vadd.f32 %v1169, %v1188
          %v1194 = vld [vmem:[%s3] sm:$0xf]
          %v1195 = vld [vmem:[%s3 + $0x4] sm:$0xf]
          %v1196 = vpack.c.bf16 %v1191, %v1190
          %v1197 = vpack.c.bf16 %v1193, %v1192
          %v1198 = vld [vmem:[%s4] sm:$0xff]
          %v1199 = vld [vmem:[%s4 + $0x8] sm:$0xff]
          %1201 = vset.pattern.permute.xlu0 0
          %1202 = vperm.xlu0 %1201, %v1198
          %v1203 = vpop.permute.xlu0 %1202
          %1206 = vset.pattern.permute.xlu0 0
          %1207 = vperm.xlu0 %1206, %v1199
          %v1208 = vpop.permute.xlu0 %1207
          %v1212 = vunpack.c.l.b16 %v1194
          %v1213 = vunpack.c.l.b16 %v1195
          %v1214 = vpack.c.b16 %v1213, %v1212
          %vm1215 = vcmask 261120
          %v1217 = vsel %vm1215, %v1214, 0
          %1219 = vmatprep.subr.bf16.mxu0 0
          %1220 = vmatpush1.bf16.msra.mxu0 %v1196
          %1221 = vmatprep.subr.bf16.mxu0 0
          %1222 = vmatpush1.bf16.msra.mxu0 %v1197
          %1223 = vmatprep.subr.bf16.mxu0 0
          %1224 = vmatpush1.bf16.msra.mxu0 0
          %1225 = vmatprep.subr.bf16.mxu0 0
          %1226 = vmatpush1.bf16.msra.mxu0 0
          %1227 = vmatprep.subr.bf16.mxu0 0
          %1228 = vmatpush1.bf16.msra.mxu0 0
          %1229 = vmatprep.subr.bf16.mxu0 0
          %1230 = vmatpush1.bf16.msra.mxu0 0
          %1231 = vmatprep.subr.bf16.mxu0 0
          %1232 = vmatpush1.bf16.msra.mxu0 0
          %1233 = vmatprep.subr.bf16.mxu0 0
          %1234 = vmatpush1.bf16.msra.mxu0 0
          %1235 = vmatprep.subr.bf16.mxu0 0
          %1236 = vmatpush1.bf16.msra.mxu0 0
          %1237 = vmatprep.subr.bf16.mxu0 0
          %1238 = vmatpush1.bf16.msra.mxu0 0
          %1239 = vmatprep.subr.bf16.mxu0 0
          %1240 = vmatpush1.bf16.msra.mxu0 0
          %1241 = vmatprep.subr.bf16.mxu0 0
          %1242 = vmatpush1.bf16.msra.mxu0 0
          %1243 = vmatprep.subr.bf16.mxu0 0
          %1244 = vmatpush1.bf16.msra.mxu0 0
          %1245 = vmatprep.subr.bf16.mxu0 0
          %1246 = vmatpush1.bf16.msra.mxu0 0
          %1247 = vmatprep.subr.bf16.mxu0 0
          %1248 = vmatpush1.bf16.msra.mxu0 0
          %1249 = vmatprep.subr.bf16.mxu0 0
          %1250 = vmatpush1.bf16.msra.mxu0 0
          %1251 = vmatprep.mubr.bf16.mxu0 0
          %1252 = vmatmul.mubr.bf16.gmra.mrb[0].mxu0 %v1217
          %v1253 = vpop.f32.mrb[0].mxu0
          %v1254 = vadd.f32 %v1203, %v1253
          %v1255 = vpop.f32.mrb[0].mxu0
          %v1256 = vpop.f32.mrb[0].mxu0
          %v1257 = vadd.f32 %v1208, %v1256
          %v1258 = vpop.f32.mrb[0].mxu0
          %1259 = vdwg.mxu0
          %v1260 = vld [vmem:[%s347] sm:$0xf]
          %v1261 = vld [vmem:[%s347 + $0x4] sm:$0xf]
          %v1262 = vunpack.c.l.bf16 %v1260
          %v1263 = vunpack.c.l.bf16 %v1261
          %v1264 = vadd.f32 %v1254, %v1262
          %v1265 = vadd.f32 %v1257, %v1263
          %v1266 = vpack.c.bf16 %v1265, %v1264
          %v1268 = vunpack.c.l.b16 %v1266
          %v1269 = vunpack.c.h.b16 %v1266
          %v1270 = vpack.c.b16 %v1268, %v1268
          %v1271 = vpack.c.b16 %v1269, %v1269
          %1274 = vst [vmem:[%s385] sm:$0xf] %v1270
          %1275 = vst [vmem:[%s385 + $0x4] sm:$0xf] %v1271
        $region109: #{tpu_custom_call.1} parent=84 // pred_fallthru
          _
        %s1276 = sand.u32 %s218, 1
        %s1277 = scalar_lea.sflag [#allocation7], %s1276
        %s1278 = sand.u32 %s218, 1
        %s1279 = smul.addr %s1278, 8
        %s1280 = scalar_lea.vmem [#allocation9], %s1279
        // Predicated region
        $region110: #{tpu_custom_call.1} parent=84 // pred_check
          %p1281 = pneg %p228
        $region111: #{tpu_custom_call.1} parent=84 // pred_check_branch
          %1283 = sbr.rel (%p1281) target = $region113
        $region112: #{tpu_custom_call.1} parent=84 // pred_region
          %p1284 = scmp.eq.s32.totalorder %s28, 2
          %s1285 = scalar_select %p1284, %s29, 0
          %s1287 = ssub.s32 128, 128
          %1288 = vsyncadd %s1277, %s1287
          %s1289 = smul.addr %s27, 8
          %s1290 = sadd.s32 %s1285, %s1289
          %s1291 = smul.addr %s1290, 64
          %s1292 = scalar_lea.hbm %s7, %s1291
          %s1293 = sshll.u32 %s1280, 4
          %s1294 = int_to_ptr.vmem [resolvable:$true] %s1293
          %1299 = dma.vmem_to_hbm [thread:$0]  %s1294, 128, %s1292, %s1277, 64, 256, 4
        $region113: #{tpu_custom_call.1} parent=84 // pred_fallthru
          _
      $region85: #{tpu_custom_call.1} parent=5 // pred_fallthru
        _
      %p1300 = scmp.le.s32.totalorder 2, %s17
      // Predicated region
      $region114: #{tpu_custom_call.1} parent=5 // pred_check
        %p1301 = pneg %p1300
      $region115: #{tpu_custom_call.1} parent=5 // pred_check_branch
        %1303 = sbr.rel (%p1301) target = $region117
      $region116: #{tpu_custom_call.1} parent=5 // pred_region
        %s1304 = ssub.s32 %s17, 2
        // Predicated region
        $region118: #{tpu_custom_call.1} parent=116 // pred_check
          %p1305 = pneg %p234
        $region119: #{tpu_custom_call.1} parent=116 // pred_check_branch
          %1307 = sbr.rel (%p1305) target = $region121
        $region120: #{tpu_custom_call.1} parent=116 // pred_region
          %s1308 = sand.u32 %s219, 1
          %s1309 = scalar_lea.sflag [#allocation7], %s1308
          %s1310 = sand.u32 %s219, 1
          %s1311 = smul.addr %s1310, 8
          %s1312 = scalar_lea.vmem [#allocation9], %s1311
          %1313 = dma.done %s1309, 128
        $region121: #{tpu_custom_call.1} parent=116 // pred_fallthru
          _
      $region117: #{tpu_custom_call.1} parent=5 // pred_fallthru
        _
    $region6: #{tpu_custom_call.1} parent=1 // loop_footer
      %s21 = sadd.s32 1, %s17
    $region7: #{tpu_custom_call.1} parent=1 // loop_footer_branch
      %16 = sbr.rel target = $region3
    $region8: #{tpu_custom_call.1} parent=1 // loop_exit
      _
    %1314 = vsyncpa [#allocation7], 1
    %s1315 = scalar_lea.sflag [#allocation7], 1
    %1316 = vsyncpa %s1315, 1
    %1317 = vsyncpa [#allocation8], 1
    %s1318 = scalar_lea.sflag [#allocation8], 1
    %1319 = vsyncpa %s1318, 1

</llo_original>
